<compile_context>
chip_gen: v7x
topology: tpu7x:2x2x1
jax: 0.10.0
libtpu: 0.0.40
codegen_flags: <defaults>
</compile_context>

<pallas_src>
import functools

import jax
import jax.numpy as jnp
from jax import lax
from jax.experimental import pallas as pl
from jax.experimental.pallas import tpu as pltpu

EPS = 1e-6  # F.pairwise_distance default


def _round_up(n, m):
    return (n + m - 1) // m * m


# ----------------------------------------------------------------------------
# Fused Pallas kernel: three 2-layer MLPs on the combined (x ++ ref) batch,
# then the full pairwise L2 distance matrix — one launch, no grid.
# ----------------------------------------------------------------------------
def _track_head_kernel(feat_ref, bbox_ref, sfeat_ref,
                       wf1_ref, bf1_ref, wf2_ref, bf2_ref,
                       wb1_ref, bb1_ref, wb2_ref, bb2_ref,
                       ws1_ref, bs1_ref, ws2_ref, bs2_ref,
                       dist_ref, *, nx_pad):
    def mlp2(a, w1_ref, b1_ref, w2_ref, b2_ref):
        # fc -> ReLU -> fc (ReLU only between the two FCs, as in the module).
        # bf16 operands on the MXU, f32 accumulate, f32 bias/ReLU epilogue.
        h = jnp.dot(a.astype(jnp.bfloat16), w1_ref[...],
                    preferred_element_type=jnp.float32) + b1_ref[...]
        h = jnp.maximum(h, 0.0)
        return jnp.dot(h.astype(jnp.bfloat16), w2_ref[...],
                       preferred_element_type=jnp.float32) + b2_ref[...]

    e_f = mlp2(feat_ref[...],  wf1_ref, bf1_ref, wf2_ref, bf2_ref)   # (R, F_f)
    e_b = mlp2(bbox_ref[...],  wb1_ref, bb1_ref, wb2_ref, bb2_ref)   # (R, F_b)
    e_s = mlp2(sfeat_ref[...], ws1_ref, bs1_ref, ws2_ref, bs2_ref)   # (R, F_s)

    # Split the combined batch: rows [0, nx_pad) are x, the rest are ref.
    # nx_pad is a multiple of 8 so this split is a free sublane-aligned view.
    # x - r + eps == (x + eps) - r, so fold eps into the x side once.
    def split(e):
        return e[:nx_pad] + EPS, e[nx_pad:]

    xf, rf = split(e_f)
    xb, rb = split(e_b)
    xs, rs = split(e_s)

    def sqnorm(m):  # (rows, 1)
        return jnp.sum(m * m, axis=-1, keepdims=True)

    # ||concat(...)||^2 terms decompose over the three groups -> no lane concat.
    xx = sqnorm(xf) + sqnorm(xb) + sqnorm(xs)            # (nx_pad, 1)
    rr = sqnorm(rf) + sqnorm(rb) + sqnorm(rs)            # (nr_pad, 1)

    # Contract last dims of both operands directly: no rf.T XLU transpose.
    dn = (((1,), (1,)), ((), ()))
    xr = (lax.dot_general(xf, rf, dn, preferred_element_type=jnp.float32)
          + lax.dot_general(xb, rb, dn, preferred_element_type=jnp.float32)
          + lax.dot_general(xs, rs, dn, preferred_element_type=jnp.float32))

    d2 = xx + jnp.transpose(rr) - 2.0 * xr               # one tiny (nr,1)->(1,nr) transpose
    dist_ref[...] = jnp.sqrt(jnp.maximum(d2, 0.0)).astype(dist_ref.dtype)


def _fused_track_head(feat, bbox, sfeat, params, nx_pad, nr_pad):
    (wf1, bf1), (wf2, bf2) = params["fcs"]
    (wb1, bb1), (wb2, bb2) = params["fcs_b"]
    (ws1, bs1), (ws2, bs2) = params["fcs_s"]
    args = (feat, bbox, sfeat,
            wf1, bf1.reshape(1, -1), wf2, bf2.reshape(1, -1),
            wb1, bb1.reshape(1, -1), wb2, bb2.reshape(1, -1),
            ws1, bs1.reshape(1, -1), ws2, bs2.reshape(1, -1))

    # Honest cost hint for XLA's scheduler.
    n_rows = feat.shape[0]
    f_total = wf2.shape[1] + wb2.shape[1] + ws2.shape[1]
    mlp_flops = 2 * n_rows * sum(int(w.shape[0] * w.shape[1])
                                 for w in (wf1, wf2, wb1, wb2, ws1, ws2))
    dist_flops = 2 * nx_pad * nr_pad * f_total
    bytes_accessed = (sum(int(a.size) * a.dtype.itemsize for a in args)
                      + nx_pad * nr_pad * 4)
    cost = pl.CostEstimate(flops=int(mlp_flops + dist_flops),
                           transcendentals=0,
                           bytes_accessed=int(bytes_accessed))

    vmem = pltpu.MemorySpace.VMEM
    return pl.pallas_call(
        functools.partial(_track_head_kernel, nx_pad=nx_pad),
        out_shape=jax.ShapeDtypeStruct((nx_pad, nr_pad), jnp.float32),
        # No grid: single invocation, whole operands resident in VMEM, no
        # double-buffering / pipeline scaffolding.
        in_specs=[pl.BlockSpec(memory_space=vmem) for _ in args],
        out_specs=pl.BlockSpec(memory_space=vmem),
        cost_estimate=cost,
    )(*args)


# ----------------------------------------------------------------------------
# TrackHead parameters + jitted forward (glue in plain JAX, one Pallas launch)
# ----------------------------------------------------------------------------
def init_track_head_params(key, *, in_channels, roi_feat_size, fc_out,
                           fc_out_b, fc_out_s, num_fcs=2):
    flat = in_channels * roi_feat_size * roi_feat_size

    def make_stack(key, dims):
        layers = []
        for d_in, d_out in zip(dims[:-1], dims[1:]):
            key, sub = jax.random.split(key)
            # Linear weights pre-transposed to (in, out); init N(0, 0.01), bias 0.
            # Stored in bf16 (halves weight DMA/VMEM); biases stay f32.
            w_t = (0.01 * jax.random.normal(sub, (d_in, d_out), jnp.float32)
                   ).astype(jnp.bfloat16)
            b = jnp.zeros((d_out,), jnp.float32)
            layers.append((w_t, b))
        return key, layers

    key, fcs = make_stack(key, [flat] + [fc_out] * num_fcs)
    key, fcs_b = make_stack(key, [4] + [fc_out_b] * num_fcs)
    # NOTE: reference module hardcodes 256*7*7 input width here; the scaled-down
    # synthetic config uses in_channels*roi^2 (same semantics).
    key, fcs_s = make_stack(key, [flat] + [fc_out_s] * num_fcs)
    return {"fcs": fcs, "fcs_b": fcs_b, "fcs_s": fcs_s}


@functools.partial(jax.jit, static_argnums=(3, 4))
def track_head_forward(params, x, ref_x, x_n, ref_x_n, x_b, ref_b, x_s, ref_s):
    assert len(x_n) == len(ref_x_n)
    n_x, n_ref = x.shape[0], ref_x.shape[0]
    assert sum(x_n) == n_x and sum(ref_x_n) == n_ref
    # x rows padded to a sublane multiple (free in-kernel split); ref rows
    # padded to a lane multiple so the distance-matrix store is lane-dense.
    nx_pad, nr_pad = _round_up(n_x, 8), _round_up(n_ref, 128)

    def pad_rows(a, rows):
        a2 = a.reshape(a.shape[0], -1)            # with_avg_pool=False: flatten NCHW
        return jnp.pad(a2, ((0, rows - a2.shape[0]), (0, 0)))

    # Combined batch: x rows in [0, nx_pad), ref rows in [nx_pad, nx_pad+nr_pad)
    feat  = jnp.concatenate([pad_rows(x,   nx_pad), pad_rows(ref_x, nr_pad)], axis=0)
    bbox  = jnp.concatenate([pad_rows(x_b, nx_pad), pad_rows(ref_b, nr_pad)], axis=0)
    sfeat = jnp.concatenate([pad_rows(x_s, nx_pad), pad_rows(ref_s, nr_pad)], axis=0)

    dist = _fused_track_head(feat, bbox, sfeat, params, nx_pad, nr_pad)

    # Ragged per-image split (x_n / ref_x_n are static tuples -> static slices).
    # Padded rows/columns of `dist` are never read.
    prods = []
    xo = ro = 0
    for xn, rn in zip(x_n, ref_x_n):
        prods.append(dist[xo:xo + xn, ro:ro + rn])
        xo += xn
        ro += rn
    return prods


# ----------------------------------------------------------------------------
# Pure-JAX reference for validation (mirrors the PyTorch forward; same bf16
# weight / bf16-activation-at-the-dot discipline, direct distance form)
# ----------------------------------------------------------------------------
def _ref_forward(params, x, ref_x, x_n, ref_x_n, x_b, ref_b, x_s, ref_s):
    def mlp(layers, a):
        for i, (w_t, b) in enumerate(layers):
            a = jnp.dot(a.astype(jnp.bfloat16), w_t,
                        preferred_element_type=jnp.float32) + b
            if i < len(layers) - 1:
                a = jnp.maximum(a, 0.0)
        return a

    xf = mlp(params["fcs"], x.reshape(x.shape[0], -1))
    rf = mlp(params["fcs"], ref_x.reshape(ref_x.shape[0], -1))
    xb = mlp(params["fcs_b"], x_b.reshape(x_b.shape[0], -1))
    rb = mlp(params["fcs_b"], ref_b.reshape(ref_b.shape[0], -1))
    xf = jnp.concatenate([xf, xb], 1); rf = jnp.concatenate([rf, rb], 1)
    xs = mlp(params["fcs_s"], x_s.reshape(x_s.shape[0], -1))
    rs = mlp(params["fcs_s"], ref_s.reshape(ref_s.shape[0], -1))
    xf = jnp.concatenate([xf, xs], 1); rf = jnp.concatenate([rf, rs], 1)

    prods = []
    xo = ro = 0
    for xn, rn in zip(x_n, ref_x_n):
        xi = xf[xo:xo + xn]; ri = rf[ro:ro + rn]
        diff = xi[:, None, :] - ri[None, :, :] + EPS
        prods.append(jnp.sqrt(jnp.sum(diff * diff, axis=-1)))
        xo += xn; ro += rn
    return prods


# ----------------------------------------------------------------------------
if __name__ == "__main__":
    # Small synthetic config consistent with the module's forward.
    IN_C, ROI = 8, 4                          # ROI features: (N, 8, 4, 4) -> flat 128
    FC_OUT, FC_OUT_B, FC_OUT_S = 128, 64, 64  # lane-friendly hidden widths

    x_n = (5, 3)              # detections per image (current frame)   - static
    ref_x_n = (4, 2)          # detections per image (reference frame) - static
    n_x, n_ref = sum(x_n), sum(ref_x_n)

    key = jax.random.PRNGKey(0)
    key, kp = jax.random.split(key)
    params = init_track_head_params(
        kp, in_channels=IN_C, roi_feat_size=ROI,
        fc_out=FC_OUT, fc_out_b=FC_OUT_B, fc_out_s=FC_OUT_S)

    ks = jax.random.split(key, 6)
    x     = jax.random.normal(ks[0], (n_x,   IN_C, ROI, ROI), jnp.float32)
    ref_x = jax.random.normal(ks[1], (n_ref, IN_C, ROI, ROI), jnp.float32)
    x_b   = jax.random.normal(ks[2], (n_x,   4), jnp.float32)
    ref_b = jax.random.normal(ks[3], (n_ref, 4), jnp.float32)
    x_s   = jax.random.normal(ks[4], (n_x,   IN_C, ROI, ROI), jnp.float32)
    ref_s = jax.random.normal(ks[5], (n_ref, IN_C, ROI, ROI), jnp.float32)

    prods = track_head_forward(params, x, ref_x, x_n, ref_x_n,
                               x_b, ref_b, x_s, ref_s)
    prods = [jax.block_until_ready(p) for p in prods]

    refs = _ref_forward(params, x, ref_x, x_n, ref_x_n, x_b, ref_b, x_s, ref_s)
    for got, want, xn, rn in zip(prods, refs, x_n, ref_x_n):
        assert got.shape == (xn, rn), (got.shape, xn, rn)
        assert jnp.allclose(got, want, rtol=1e-3, atol=1e-4), (got, want)

    print("KERNEL_OK")
</pallas_src>

<mosaic_0001>
module attributes {stable_mosaic.version = 11 : i64} {
  func.func @_track_head_kernel(%arg0: memref<136x128xf32, #tpu.memory_space<vmem>>, %arg1: memref<136x4xf32, #tpu.memory_space<vmem>>, %arg2: memref<136x128xf32, #tpu.memory_space<vmem>>, %arg3: memref<128x128xbf16, #tpu.memory_space<vmem>>, %arg4: memref<1x128xf32, #tpu.memory_space<vmem>>, %arg5: memref<128x128xbf16, #tpu.memory_space<vmem>>, %arg6: memref<1x128xf32, #tpu.memory_space<vmem>>, %arg7: memref<4x64xbf16, #tpu.memory_space<vmem>>, %arg8: memref<1x64xf32, #tpu.memory_space<vmem>>, %arg9: memref<64x64xbf16, #tpu.memory_space<vmem>>, %arg10: memref<1x64xf32, #tpu.memory_space<vmem>>, %arg11: memref<128x64xbf16, #tpu.memory_space<vmem>>, %arg12: memref<1x64xf32, #tpu.memory_space<vmem>>, %arg13: memref<64x64xbf16, #tpu.memory_space<vmem>>, %arg14: memref<1x64xf32, #tpu.memory_space<vmem>>, %arg15: memref<8x128xf32, #tpu.memory_space<vmem>>) attributes {dimension_semantics = [], scalar_prefetch = 0 : i64, scratch_operands = 0 : i64, tpu.core_type = #tpu.core_type<tc>} {
    %c0 = arith.constant 0 : index
    %c0_0 = arith.constant 0 : index
    %0 = vector.load %arg0[%c0, %c0_0] : memref<136x128xf32, #tpu.memory_space<vmem>>, vector<136x128xf32>
    %1 = arith.truncf %0 : vector<136x128xf32> to vector<136x128xbf16>
    %c0_1 = arith.constant 0 : index
    %c0_2 = arith.constant 0 : index
    %2 = vector.load %arg3[%c0_1, %c0_2] : memref<128x128xbf16, #tpu.memory_space<vmem>>, vector<128x128xbf16>
    %cst = arith.constant dense<0.000000e+00> : vector<136x128xf32>
    %3 = tpu.matmul %1, %2, %cst {dimension_numbers = #tpu.dot_dimension_numbers<[1], [0], [0], [1], [0, 0, 1, 1], [], []>} : vector<136x128xbf16>, vector<128x128xbf16>, vector<136x128xf32> -> vector<136x128xf32>
    %c0_3 = arith.constant 0 : index
    %c0_4 = arith.constant 0 : index
    %4 = vector.load %arg4[%c0_3, %c0_4] : memref<1x128xf32, #tpu.memory_space<vmem>>, vector<1x128xf32>
    %5 = vector.broadcast %4 : vector<1x128xf32> to vector<136x128xf32>
    %6 = arith.addf %3, %5 : vector<136x128xf32>
    %cst_5 = arith.constant 0.000000e+00 : f32
    %7 = vector.broadcast %cst_5 : f32 to vector<136x128xf32>
    %8 = arith.maximumf %6, %7 : vector<136x128xf32>
    %9 = arith.truncf %8 : vector<136x128xf32> to vector<136x128xbf16>
    %c0_6 = arith.constant 0 : index
    %c0_7 = arith.constant 0 : index
    %10 = vector.load %arg5[%c0_6, %c0_7] : memref<128x128xbf16, #tpu.memory_space<vmem>>, vector<128x128xbf16>
    %cst_8 = arith.constant dense<0.000000e+00> : vector<136x128xf32>
    %11 = tpu.matmul %9, %10, %cst_8 {dimension_numbers = #tpu.dot_dimension_numbers<[1], [0], [0], [1], [0, 0, 1, 1], [], []>} : vector<136x128xbf16>, vector<128x128xbf16>, vector<136x128xf32> -> vector<136x128xf32>
    %c0_9 = arith.constant 0 : index
    %c0_10 = arith.constant 0 : index
    %12 = vector.load %arg6[%c0_9, %c0_10] : memref<1x128xf32, #tpu.memory_space<vmem>>, vector<1x128xf32>
    %13 = vector.broadcast %12 : vector<1x128xf32> to vector<136x128xf32>
    %14 = arith.addf %11, %13 : vector<136x128xf32>
    %c0_11 = arith.constant 0 : index
    %c0_12 = arith.constant 0 : index
    %15 = vector.load %arg1[%c0_11, %c0_12] : memref<136x4xf32, #tpu.memory_space<vmem>>, vector<136x4xf32>
    %16 = arith.truncf %15 : vector<136x4xf32> to vector<136x4xbf16>
    %c0_13 = arith.constant 0 : index
    %c0_14 = arith.constant 0 : index
    %17 = vector.load %arg7[%c0_13, %c0_14] : memref<4x64xbf16, #tpu.memory_space<vmem>>, vector<4x64xbf16>
    %cst_15 = arith.constant dense<0.000000e+00> : vector<136x64xf32>
    %18 = tpu.matmul %16, %17, %cst_15 {dimension_numbers = #tpu.dot_dimension_numbers<[1], [0], [0], [1], [0, 0, 1, 1], [], []>} : vector<136x4xbf16>, vector<4x64xbf16>, vector<136x64xf32> -> vector<136x64xf32>
    %c0_16 = arith.constant 0 : index
    %c0_17 = arith.constant 0 : index
    %19 = vector.load %arg8[%c0_16, %c0_17] : memref<1x64xf32, #tpu.memory_space<vmem>>, vector<1x64xf32>
    %20 = vector.broadcast %19 : vector<1x64xf32> to vector<136x64xf32>
    %21 = arith.addf %18, %20 : vector<136x64xf32>
    %cst_18 = arith.constant 0.000000e+00 : f32
    %22 = vector.broadcast %cst_18 : f32 to vector<136x64xf32>
    %23 = arith.maximumf %21, %22 : vector<136x64xf32>
    %24 = arith.truncf %23 : vector<136x64xf32> to vector<136x64xbf16>
    %c0_19 = arith.constant 0 : index
    %c0_20 = arith.constant 0 : index
    %25 = vector.load %arg9[%c0_19, %c0_20] : memref<64x64xbf16, #tpu.memory_space<vmem>>, vector<64x64xbf16>
    %cst_21 = arith.constant dense<0.000000e+00> : vector<136x64xf32>
    %26 = tpu.matmul %24, %25, %cst_21 {dimension_numbers = #tpu.dot_dimension_numbers<[1], [0], [0], [1], [0, 0, 1, 1], [], []>} : vector<136x64xbf16>, vector<64x64xbf16>, vector<136x64xf32> -> vector<136x64xf32>
    %c0_22 = arith.constant 0 : index
    %c0_23 = arith.constant 0 : index
    %27 = vector.load %arg10[%c0_22, %c0_23] : memref<1x64xf32, #tpu.memory_space<vmem>>, vector<1x64xf32>
    %28 = vector.broadcast %27 : vector<1x64xf32> to vector<136x64xf32>
    %29 = arith.addf %26, %28 : vector<136x64xf32>
    %c0_24 = arith.constant 0 : index
    %c0_25 = arith.constant 0 : index
    %30 = vector.load %arg2[%c0_24, %c0_25] : memref<136x128xf32, #tpu.memory_space<vmem>>, vector<136x128xf32>
    %31 = arith.truncf %30 : vector<136x128xf32> to vector<136x128xbf16>
    %c0_26 = arith.constant 0 : index
    %c0_27 = arith.constant 0 : index
    %32 = vector.load %arg11[%c0_26, %c0_27] : memref<128x64xbf16, #tpu.memory_space<vmem>>, vector<128x64xbf16>
    %cst_28 = arith.constant dense<0.000000e+00> : vector<136x64xf32>
    %33 = tpu.matmul %31, %32, %cst_28 {dimension_numbers = #tpu.dot_dimension_numbers<[1], [0], [0], [1], [0, 0, 1, 1], [], []>} : vector<136x128xbf16>, vector<128x64xbf16>, vector<136x64xf32> -> vector<136x64xf32>
    %c0_29 = arith.constant 0 : index
    %c0_30 = arith.constant 0 : index
    %34 = vector.load %arg12[%c0_29, %c0_30] : memref<1x64xf32, #tpu.memory_space<vmem>>, vector<1x64xf32>
    %35 = vector.broadcast %34 : vector<1x64xf32> to vector<136x64xf32>
    %36 = arith.addf %33, %35 : vector<136x64xf32>
    %cst_31 = arith.constant 0.000000e+00 : f32
    %37 = vector.broadcast %cst_31 : f32 to vector<136x64xf32>
    %38 = arith.maximumf %36, %37 : vector<136x64xf32>
    %39 = arith.truncf %38 : vector<136x64xf32> to vector<136x64xbf16>
    %c0_32 = arith.constant 0 : index
    %c0_33 = arith.constant 0 : index
    %40 = vector.load %arg13[%c0_32, %c0_33] : memref<64x64xbf16, #tpu.memory_space<vmem>>, vector<64x64xbf16>
    %cst_34 = arith.constant dense<0.000000e+00> : vector<136x64xf32>
    %41 = tpu.matmul %39, %40, %cst_34 {dimension_numbers = #tpu.dot_dimension_numbers<[1], [0], [0], [1], [0, 0, 1, 1], [], []>} : vector<136x64xbf16>, vector<64x64xbf16>, vector<136x64xf32> -> vector<136x64xf32>
    %c0_35 = arith.constant 0 : index
    %c0_36 = arith.constant 0 : index
    %42 = vector.load %arg14[%c0_35, %c0_36] : memref<1x64xf32, #tpu.memory_space<vmem>>, vector<1x64xf32>
    %43 = vector.broadcast %42 : vector<1x64xf32> to vector<136x64xf32>
    %44 = arith.addf %41, %43 : vector<136x64xf32>
    %45 = vector.extract_strided_slice %14 {offsets = [0, 0], sizes = [8, 128], strides = [1, 1]} : vector<136x128xf32> to vector<8x128xf32>
    %cst_37 = arith.constant 9.99999997E-7 : f32
    %46 = vector.broadcast %cst_37 : f32 to vector<8x128xf32>
    %47 = arith.addf %45, %46 : vector<8x128xf32>
    %48 = vector.extract_strided_slice %14 {offsets = [8, 0], sizes = [128, 128], strides = [1, 1]} : vector<136x128xf32> to vector<128x128xf32>
    %49 = vector.extract_strided_slice %29 {offsets = [0, 0], sizes = [8, 64], strides = [1, 1]} : vector<136x64xf32> to vector<8x64xf32>
    %cst_38 = arith.constant 9.99999997E-7 : f32
    %50 = vector.broadcast %cst_38 : f32 to vector<8x64xf32>
    %51 = arith.addf %49, %50 : vector<8x64xf32>
    %52 = vector.extract_strided_slice %29 {offsets = [8, 0], sizes = [128, 64], strides = [1, 1]} : vector<136x64xf32> to vector<128x64xf32>
    %53 = vector.extract_strided_slice %44 {offsets = [0, 0], sizes = [8, 64], strides = [1, 1]} : vector<136x64xf32> to vector<8x64xf32>
    %cst_39 = arith.constant 9.99999997E-7 : f32
    %54 = vector.broadcast %cst_39 : f32 to vector<8x64xf32>
    %55 = arith.addf %53, %54 : vector<8x64xf32>
    %56 = vector.extract_strided_slice %44 {offsets = [8, 0], sizes = [128, 64], strides = [1, 1]} : vector<136x64xf32> to vector<128x64xf32>
    %57 = arith.mulf %47, %47 : vector<8x128xf32>
    %cst_40 = arith.constant dense<0.000000e+00> : vector<8xf32>
    %58 = vector.multi_reduction <add>, %57, %cst_40 [1] : vector<8x128xf32> to vector<8xf32>
    %59 = vector.shape_cast %58 : vector<8xf32> to vector<8x1xf32>
    %60 = arith.mulf %51, %51 : vector<8x64xf32>
    %cst_41 = arith.constant dense<0.000000e+00> : vector<8xf32>
    %61 = vector.multi_reduction <add>, %60, %cst_41 [1] : vector<8x64xf32> to vector<8xf32>
    %62 = vector.shape_cast %61 : vector<8xf32> to vector<8x1xf32>
    %63 = arith.addf %59, %62 : vector<8x1xf32>
    %64 = arith.mulf %55, %55 : vector<8x64xf32>
    %cst_42 = arith.constant dense<0.000000e+00> : vector<8xf32>
    %65 = vector.multi_reduction <add>, %64, %cst_42 [1] : vector<8x64xf32> to vector<8xf32>
    %66 = vector.shape_cast %65 : vector<8xf32> to vector<8x1xf32>
    %67 = arith.addf %63, %66 : vector<8x1xf32>
    %68 = arith.mulf %48, %48 : vector<128x128xf32>
    %cst_43 = arith.constant dense<0.000000e+00> : vector<128xf32>
    %69 = vector.multi_reduction <add>, %68, %cst_43 [1] : vector<128x128xf32> to vector<128xf32>
    %70 = vector.shape_cast %69 : vector<128xf32> to vector<128x1xf32>
    %71 = arith.mulf %52, %52 : vector<128x64xf32>
    %cst_44 = arith.constant dense<0.000000e+00> : vector<128xf32>
    %72 = vector.multi_reduction <add>, %71, %cst_44 [1] : vector<128x64xf32> to vector<128xf32>
    %73 = vector.shape_cast %72 : vector<128xf32> to vector<128x1xf32>
    %74 = arith.addf %70, %73 : vector<128x1xf32>
    %75 = arith.mulf %56, %56 : vector<128x64xf32>
    %cst_45 = arith.constant dense<0.000000e+00> : vector<128xf32>
    %76 = vector.multi_reduction <add>, %75, %cst_45 [1] : vector<128x64xf32> to vector<128xf32>
    %77 = vector.shape_cast %76 : vector<128xf32> to vector<128x1xf32>
    %78 = arith.addf %74, %77 : vector<128x1xf32>
    %cst_46 = arith.constant dense<0.000000e+00> : vector<8x128xf32>
    %79 = tpu.matmul %47, %48, %cst_46 {dimension_numbers = #tpu.dot_dimension_numbers<[1], [1], [0], [0], [0, 0, 1, 0], [], []>} : vector<8x128xf32>, vector<128x128xf32>, vector<8x128xf32> -> vector<8x128xf32>
    %cst_47 = arith.constant dense<0.000000e+00> : vector<8x128xf32>
    %80 = tpu.matmul %51, %52, %cst_47 {dimension_numbers = #tpu.dot_dimension_numbers<[1], [1], [0], [0], [0, 0, 1, 0], [], []>} : vector<8x64xf32>, vector<128x64xf32>, vector<8x128xf32> -> vector<8x128xf32>
    %81 = arith.addf %79, %80 : vector<8x128xf32>
    %cst_48 = arith.constant dense<0.000000e+00> : vector<8x128xf32>
    %82 = tpu.matmul %55, %56, %cst_48 {dimension_numbers = #tpu.dot_dimension_numbers<[1], [1], [0], [0], [0, 0, 1, 0], [], []>} : vector<8x64xf32>, vector<128x64xf32>, vector<8x128xf32> -> vector<8x128xf32>
    %83 = arith.addf %81, %82 : vector<8x128xf32>
    %84 = tpu.transpose %78, [1, 0] : vector<128x1xf32> -> vector<1x128xf32>
    %85 = vector.broadcast %67 : vector<8x1xf32> to vector<8x128xf32>
    %86 = vector.broadcast %84 : vector<1x128xf32> to vector<8x128xf32>
    %87 = arith.addf %85, %86 : vector<8x128xf32>
    %cst_49 = arith.constant 2.000000e+00 : f32
    %88 = vector.broadcast %cst_49 : f32 to vector<8x128xf32>
    %89 = arith.mulf %88, %83 : vector<8x128xf32>
    %90 = arith.subf %87, %89 : vector<8x128xf32>
    %cst_50 = arith.constant 0.000000e+00 : f32
    %91 = vector.broadcast %cst_50 : f32 to vector<8x128xf32>
    %92 = arith.maximumf %90, %91 : vector<8x128xf32>
    %93 = math.sqrt %92 : vector<8x128xf32>
    %c0_51 = arith.constant 0 : index
    %c0_52 = arith.constant 0 : index
    %94 = vector.load %arg15[%c0_51, %c0_52] : memref<8x128xf32, #tpu.memory_space<vmem>>, vector<8x128xf32>
    tpu.vector_store %arg15[%c0_51, %c0_52], %93 {strides = array<i32>} : memref<8x128xf32, #tpu.memory_space<vmem>>, vector<8x128xf32>,
    return
  }
}

</mosaic_0001>

<llo_original>
// kernel: track_head_forward.1
$region0: #{track_head_forward.1}
  #allocation0 [shape = 'u32[]', space=smem, size = 0x4, offset = 0x4, fixed_abs, tag = 'smem constant byte address 0x4 - core index']
  #allocation1 [shape = 'u32[144,128]{1,0:T(1,128)}', space=vmem, size = 0x12000, scoped, tag = 'internal scratch']
  %s0 = inlined_call_operand.vmem [shape: f32[136,128], index: 0, kind: input, shape index: {}]
  %s1 = inlined_call_operand.vmem [shape: f32[136,4], index: 1, kind: input, shape index: {}]
  %s2 = inlined_call_operand.vmem [shape: f32[136,128], index: 2, kind: input, shape index: {}]
  %s3 = inlined_call_operand.vmem [shape: bf16[128,128], index: 3, kind: input, shape index: {}]
  %s4 = inlined_call_operand.vmem [shape: f32[1,128], index: 4, kind: input, shape index: {}]
  %s5 = inlined_call_operand.vmem [shape: bf16[128,128], index: 5, kind: input, shape index: {}]
  %s6 = inlined_call_operand.vmem [shape: f32[1,128], index: 6, kind: input, shape index: {}]
  %s7 = inlined_call_operand.vmem [shape: bf16[4,64], index: 7, kind: input, shape index: {}]
  %s8 = inlined_call_operand.vmem [shape: f32[1,64], index: 8, kind: input, shape index: {}]
  %s9 = inlined_call_operand.vmem [shape: bf16[64,64], index: 9, kind: input, shape index: {}]
  %s10 = inlined_call_operand.vmem [shape: f32[1,64], index: 10, kind: input, shape index: {}]
  %s11 = inlined_call_operand.vmem [shape: bf16[128,64], index: 11, kind: input, shape index: {}]
  %s12 = inlined_call_operand.vmem [shape: f32[1,64], index: 12, kind: input, shape index: {}]
  %s13 = inlined_call_operand.vmem [shape: bf16[64,64], index: 13, kind: input, shape index: {}]
  %s14 = inlined_call_operand.vmem [shape: f32[1,64], index: 14, kind: input, shape index: {}]
  %s15 = inlined_call_operand.vmem [shape: f32[8,128], index: 15, kind: output, shape index: {}]
  %s16 = sld [smem:[#allocation0]]
  $region70: #{track_head_forward.1} parent=0
    _
  %s18 = ssub.s32 1, %s16
  %s19 = scalar_select 0, %s18, %s16
  // Predicated region
  $region2: #{track_head_forward.1} parent=0 // pred_check
    _
  $region3: #{track_head_forward.1} parent=0 // pred_check_branch
    %21 = sbr.rel (0) target = $region5
  $region4: #{track_head_forward.1} parent=0 // pred_region
    _
  $region5: #{track_head_forward.1} parent=0 // pred_fallthru
    _
  // Predicated region
  $region6: #{track_head_forward.1} parent=0 // pred_check
    _
  $region7: #{track_head_forward.1} parent=0 // pred_check_branch
    %23 = sbr.rel (0) target = $region9
  $region8: #{track_head_forward.1} parent=0 // pred_region
    _
  $region9: #{track_head_forward.1} parent=0 // pred_fallthru
    _
  // Predicated region
  $region10: #{track_head_forward.1} parent=0 // pred_check
    _
  $region11: #{track_head_forward.1} parent=0 // pred_check_branch
    %25 = sbr.rel (0) target = $region13
  $region12: #{track_head_forward.1} parent=0 // pred_region
    _
  $region13: #{track_head_forward.1} parent=0 // pred_fallthru
    _
  // Predicated region
  $region14: #{track_head_forward.1} parent=0 // pred_check
    _
  $region15: #{track_head_forward.1} parent=0 // pred_check_branch
    %27 = sbr.rel (0) target = $region17
  $region16: #{track_head_forward.1} parent=0 // pred_region
    _
  $region17: #{track_head_forward.1} parent=0 // pred_fallthru
    _
  // Predicated region
  $region18: #{track_head_forward.1} parent=0 // pred_check
    _
  $region19: #{track_head_forward.1} parent=0 // pred_check_branch
    %29 = sbr.rel (0) target = $region21
  $region20: #{track_head_forward.1} parent=0 // pred_region
    _
  $region21: #{track_head_forward.1} parent=0 // pred_fallthru
    _
  // Predicated region
  $region22: #{track_head_forward.1} parent=0 // pred_check
    _
  $region23: #{track_head_forward.1} parent=0 // pred_check_branch
    %31 = sbr.rel (0) target = $region25
  $region24: #{track_head_forward.1} parent=0 // pred_region
    _
  $region25: #{track_head_forward.1} parent=0 // pred_fallthru
    _
  // Predicated region
  $region26: #{track_head_forward.1} parent=0 // pred_check
    _
  $region27: #{track_head_forward.1} parent=0 // pred_check_branch
    %33 = sbr.rel (0) target = $region29
  $region28: #{track_head_forward.1} parent=0 // pred_region
    _
  $region29: #{track_head_forward.1} parent=0 // pred_fallthru
    _
  // Predicated region
  $region30: #{track_head_forward.1} parent=0 // pred_check
    _
  $region31: #{track_head_forward.1} parent=0 // pred_check_branch
    %35 = sbr.rel (0) target = $region33
  $region32: #{track_head_forward.1} parent=0 // pred_region
    _
  $region33: #{track_head_forward.1} parent=0 // pred_fallthru
    _
  // Predicated region
  $region34: #{track_head_forward.1} parent=0 // pred_check
    _
  $region35: #{track_head_forward.1} parent=0 // pred_check_branch
    %37 = sbr.rel (0) target = $region37
  $region36: #{track_head_forward.1} parent=0 // pred_region
    _
  $region37: #{track_head_forward.1} parent=0 // pred_fallthru
    _
  // Predicated region
  $region38: #{track_head_forward.1} parent=0 // pred_check
    _
  $region39: #{track_head_forward.1} parent=0 // pred_check_branch
    %39 = sbr.rel (0) target = $region41
  $region40: #{track_head_forward.1} parent=0 // pred_region
    _
  $region41: #{track_head_forward.1} parent=0 // pred_fallthru
    _
  // Predicated region
  $region42: #{track_head_forward.1} parent=0 // pred_check
    _
  $region43: #{track_head_forward.1} parent=0 // pred_check_branch
    %41 = sbr.rel (0) target = $region45
  $region44: #{track_head_forward.1} parent=0 // pred_region
    _
  $region45: #{track_head_forward.1} parent=0 // pred_fallthru
    _
  // Predicated region
  $region46: #{track_head_forward.1} parent=0 // pred_check
    _
  $region47: #{track_head_forward.1} parent=0 // pred_check_branch
    %43 = sbr.rel (0) target = $region49
  $region48: #{track_head_forward.1} parent=0 // pred_region
    _
  $region49: #{track_head_forward.1} parent=0 // pred_fallthru
    _
  // Predicated region
  $region50: #{track_head_forward.1} parent=0 // pred_check
    _
  $region51: #{track_head_forward.1} parent=0 // pred_check_branch
    %45 = sbr.rel (0) target = $region53
  $region52: #{track_head_forward.1} parent=0 // pred_region
    _
  $region53: #{track_head_forward.1} parent=0 // pred_fallthru
    _
  // Predicated region
  $region54: #{track_head_forward.1} parent=0 // pred_check
    _
  $region55: #{track_head_forward.1} parent=0 // pred_check_branch
    %47 = sbr.rel (0) target = $region57
  $region56: #{track_head_forward.1} parent=0 // pred_region
    _
  $region57: #{track_head_forward.1} parent=0 // pred_fallthru
    _
  // Predicated region
  $region58: #{track_head_forward.1} parent=0 // pred_check
    _
  $region59: #{track_head_forward.1} parent=0 // pred_check_branch
    %49 = sbr.rel (0) target = $region61
  $region60: #{track_head_forward.1} parent=0 // pred_region
    _
  $region61: #{track_head_forward.1} parent=0 // pred_fallthru
    _
  %v51 = vld [vmem:[%s0] sm:$0xff]
  %v52 = vld [vmem:[%s0 + $0x8] sm:$0xff]
  %v53 = vld [vmem:[%s0 + $0x10] sm:$0xff]
  %v54 = vld [vmem:[%s0 + $0x18] sm:$0xff]
  %v55 = vld [vmem:[%s0 + $0x20] sm:$0xff]
  %v56 = vld [vmem:[%s0 + $0x28] sm:$0xff]
  %v57 = vld [vmem:[%s0 + $0x30] sm:$0xff]
  %v58 = vld [vmem:[%s0 + $0x38] sm:$0xff]
  %v59 = vld [vmem:[%s0 + $0x40] sm:$0xff]
  %v60 = vld [vmem:[%s0 + $0x48] sm:$0xff]
  %v61 = vld [vmem:[%s0 + $0x50] sm:$0xff]
  %v62 = vld [vmem:[%s0 + $0x58] sm:$0xff]
  %v63 = vld [vmem:[%s0 + $0x60] sm:$0xff]
  %v64 = vld [vmem:[%s0 + $0x68] sm:$0xff]
  %v65 = vld [vmem:[%s0 + $0x70] sm:$0xff]
  %v66 = vld [vmem:[%s0 + $0x78] sm:$0xff]
  %v67 = vld [vmem:[%s0 + $0x80] sm:$0xff]
  %v68 = vpack.c.bf16 %v52, %v51
  %v69 = vpack.c.bf16 %v54, %v53
  %v70 = vpack.c.bf16 %v56, %v55
  %v71 = vpack.c.bf16 %v58, %v57
  %v72 = vpack.c.bf16 %v60, %v59
  %v73 = vpack.c.bf16 %v62, %v61
  %v74 = vpack.c.bf16 %v64, %v63
  %v75 = vpack.c.bf16 %v66, %v65
  %v76 = vpack.c.bf16 %v67, %v67
  %v77 = vld [vmem:[%s3] sm:$0xf]
  %v78 = vld [vmem:[%s3 + $0x4] sm:$0xf]
  %v79 = vld [vmem:[%s3 + $0x8] sm:$0xf]
  %v80 = vld [vmem:[%s3 + $0xc] sm:$0xf]
  %v81 = vld [vmem:[%s3 + $0x10] sm:$0xf]
  %v82 = vld [vmem:[%s3 + $0x14] sm:$0xf]
  %v83 = vld [vmem:[%s3 + $0x18] sm:$0xf]
  %v84 = vld [vmem:[%s3 + $0x1c] sm:$0xf]
  %v85 = vld [vmem:[%s3 + $0x20] sm:$0xf]
  %v86 = vld [vmem:[%s3 + $0x24] sm:$0xf]
  %v87 = vld [vmem:[%s3 + $0x28] sm:$0xf]
  %v88 = vld [vmem:[%s3 + $0x2c] sm:$0xf]
  %v89 = vld [vmem:[%s3 + $0x30] sm:$0xf]
  %v90 = vld [vmem:[%s3 + $0x34] sm:$0xf]
  %v91 = vld [vmem:[%s3 + $0x38] sm:$0xf]
  %v92 = vld [vmem:[%s3 + $0x3c] sm:$0xf]
  %v93 = vld [vmem:[%s4] sm:$0x1]
  %v95 = vlaneseq
  %v96 = vshrl.u32 %v95, 7
  %v97 = vsub.s32 0, %v96
  %v98 = vrot.slane %v93, %v97
  %v116 = vunpack.c.l.b16 %v77
  %v117 = vunpack.c.l.b16 %v78
  %v118 = vunpack.c.l.b16 %v79
  %v119 = vunpack.c.l.b16 %v80
  %v120 = vunpack.c.l.b16 %v81
  %v121 = vunpack.c.l.b16 %v82
  %v122 = vunpack.c.l.b16 %v83
  %v123 = vunpack.c.l.b16 %v84
  %v124 = vunpack.c.l.b16 %v85
  %v125 = vunpack.c.l.b16 %v86
  %v126 = vunpack.c.l.b16 %v87
  %v127 = vunpack.c.l.b16 %v88
  %v128 = vunpack.c.l.b16 %v89
  %v129 = vunpack.c.l.b16 %v90
  %v130 = vunpack.c.l.b16 %v91
  %v131 = vunpack.c.l.b16 %v92
  %v132 = vpack.c.b16 %v117, %v116
  %v133 = vpack.c.b16 %v119, %v118
  %v134 = vpack.c.b16 %v121, %v120
  %v135 = vpack.c.b16 %v123, %v122
  %v136 = vpack.c.b16 %v125, %v124
  %v137 = vpack.c.b16 %v127, %v126
  %v138 = vpack.c.b16 %v129, %v128
  %v139 = vpack.c.b16 %v131, %v130
  %148 = vmatprep.subr.bf16.mxu0 0
  %149 = vmatpush1.bf16.msra.mxu0 %v132
  %150 = vmatprep.subr.bf16.mxu0 0
  %151 = vmatpush1.bf16.msra.mxu0 %v133
  %152 = vmatprep.subr.bf16.mxu0 0
  %153 = vmatpush1.bf16.msra.mxu0 %v134
  %154 = vmatprep.subr.bf16.mxu0 0
  %155 = vmatpush1.bf16.msra.mxu0 %v135
  %156 = vmatprep.subr.bf16.mxu0 0
  %157 = vmatpush1.bf16.msra.mxu0 %v136
  %158 = vmatprep.subr.bf16.mxu0 0
  %159 = vmatpush1.bf16.msra.mxu0 %v137
  %160 = vmatprep.subr.bf16.mxu0 0
  %161 = vmatpush1.bf16.msra.mxu0 %v138
  %162 = vmatprep.subr.bf16.mxu0 0
  %163 = vmatpush1.bf16.msra.mxu0 %v139
  %164 = vmatprep.subr.bf16.mxu0 0
  %165 = vmatpush1.bf16.msra.mxu0 0
  %166 = vmatprep.subr.bf16.mxu0 0
  %167 = vmatpush1.bf16.msra.mxu0 0
  %168 = vmatprep.subr.bf16.mxu0 0
  %169 = vmatpush1.bf16.msra.mxu0 0
  %170 = vmatprep.subr.bf16.mxu0 0
  %171 = vmatpush1.bf16.msra.mxu0 0
  %172 = vmatprep.subr.bf16.mxu0 0
  %173 = vmatpush1.bf16.msra.mxu0 0
  %174 = vmatprep.subr.bf16.mxu0 0
  %175 = vmatpush1.bf16.msra.mxu0 0
  %176 = vmatprep.subr.bf16.mxu0 0
  %177 = vmatpush1.bf16.msra.mxu0 0
  %178 = vmatprep.subr.bf16.mxu0 0
  %179 = vmatpush1.bf16.msra.mxu0 0
  %180 = vmatprep.mubr.bf16.mxu0 0
  %181 = vmatmul.mubr.bf16.gmra.mrb[0].mxu0 %v68
  %v182 = vpop.f32.mrb[0].mxu0
  %v183 = vadd.f32 %v98, %v182
  %v184 = vpop.f32.mrb[0].mxu0
  %v185 = vpop.f32.mrb[0].mxu0
  %v186 = vadd.f32 %v98, %v185
  %v187 = vpop.f32.mrb[0].mxu0
  %188 = vmatprep.mubr.bf16.mxu0 0
  %189 = vmatmul.mubr.bf16.gmra.mrb[0].mxu0 %v69
  %v190 = vpop.f32.mrb[0].mxu0
  %v191 = vadd.f32 %v98, %v190
  %v192 = vpop.f32.mrb[0].mxu0
  %v193 = vpop.f32.mrb[0].mxu0
  %v194 = vadd.f32 %v98, %v193
  %v195 = vpop.f32.mrb[0].mxu0
  %196 = vmatprep.mubr.bf16.mxu0 0
  %197 = vmatmul.mubr.bf16.gmra.mrb[0].mxu0 %v70
  %v198 = vpop.f32.mrb[0].mxu0
  %v199 = vadd.f32 %v98, %v198
  %v200 = vpop.f32.mrb[0].mxu0
  %v201 = vpop.f32.mrb[0].mxu0
  %v202 = vadd.f32 %v98, %v201
  %v203 = vpop.f32.mrb[0].mxu0
  %204 = vmatprep.mubr.bf16.mxu0 0
  %205 = vmatmul.mubr.bf16.gmra.mrb[0].mxu0 %v71
  %v206 = vpop.f32.mrb[0].mxu0
  %v207 = vadd.f32 %v98, %v206
  %v208 = vpop.f32.mrb[0].mxu0
  %v209 = vpop.f32.mrb[0].mxu0
  %v210 = vadd.f32 %v98, %v209
  %v211 = vpop.f32.mrb[0].mxu0
  %212 = vmatprep.mubr.bf16.mxu0 0
  %213 = vmatmul.mubr.bf16.gmra.mrb[0].mxu0 %v72
  %v214 = vpop.f32.mrb[0].mxu0
  %v215 = vadd.f32 %v98, %v214
  %v216 = vpop.f32.mrb[0].mxu0
  %v217 = vpop.f32.mrb[0].mxu0
  %v218 = vadd.f32 %v98, %v217
  %v219 = vpop.f32.mrb[0].mxu0
  %220 = vmatprep.mubr.bf16.mxu0 0
  %221 = vmatmul.mubr.bf16.gmra.mrb[0].mxu0 %v73
  %v222 = vpop.f32.mrb[0].mxu0
  %v223 = vadd.f32 %v98, %v222
  %v224 = vpop.f32.mrb[0].mxu0
  %v225 = vpop.f32.mrb[0].mxu0
  %v226 = vadd.f32 %v98, %v225
  %v227 = vpop.f32.mrb[0].mxu0
  %228 = vmatprep.mubr.bf16.mxu0 0
  %229 = vmatmul.mubr.bf16.gmra.mrb[0].mxu0 %v74
  %v230 = vpop.f32.mrb[0].mxu0
  %v231 = vadd.f32 %v98, %v230
  %v232 = vpop.f32.mrb[0].mxu0
  %v233 = vpop.f32.mrb[0].mxu0
  %v234 = vadd.f32 %v98, %v233
  %v235 = vpop.f32.mrb[0].mxu0
  %236 = vmatprep.mubr.bf16.mxu0 0
  %237 = vmatmul.mubr.bf16.gmra.mrb[0].mxu0 %v75
  %v238 = vpop.f32.mrb[0].mxu0
  %v239 = vadd.f32 %v98, %v238
  %v240 = vpop.f32.mrb[0].mxu0
  %v241 = vpop.f32.mrb[0].mxu0
  %v242 = vadd.f32 %v98, %v241
  %v243 = vpop.f32.mrb[0].mxu0
  %244 = vmatprep.mubr.bf16.mxu0 0
  %245 = vmatmul.mubr.bf16.gmra.mrb[0].mxu0 %v76
  %v246 = vpop.f32.mrb[0].mxu0
  %v247 = vadd.f32 %v98, %v246
  %v248 = vpop.f32.mrb[0].mxu0
  %v249 = vpop.f32.mrb[0].mxu0
  %v250 = vpop.f32.mrb[0].mxu0
  %251 = vdwg.mxu0
  %v252 = vmax.f32 %v183, 0.0
  %v253 = vmax.f32 %v186, 0.0
  %v254 = vmax.f32 %v191, 0.0
  %v255 = vmax.f32 %v194, 0.0
  %v256 = vmax.f32 %v199, 0.0
  %v257 = vmax.f32 %v202, 0.0
  %v258 = vmax.f32 %v207, 0.0
  %v259 = vmax.f32 %v210, 0.0
  %v260 = vmax.f32 %v215, 0.0
  %v261 = vmax.f32 %v218, 0.0
  %v262 = vmax.f32 %v223, 0.0
  %v263 = vmax.f32 %v226, 0.0
  %v264 = vmax.f32 %v231, 0.0
  %v265 = vmax.f32 %v234, 0.0
  %v266 = vmax.f32 %v239, 0.0
  %v267 = vmax.f32 %v242, 0.0
  %v268 = vmax.f32 %v247, 0.0
  %v269 = vpack.c.bf16 %v253, %v252
  %v270 = vpack.c.bf16 %v255, %v254
  %v271 = vpack.c.bf16 %v257, %v256
  %v272 = vpack.c.bf16 %v259, %v258
  %v273 = vpack.c.bf16 %v261, %v260
  %v274 = vpack.c.bf16 %v263, %v262
  %v275 = vpack.c.bf16 %v265, %v264
  %v276 = vpack.c.bf16 %v267, %v266
  %v277 = vpack.c.bf16 %v268, %v268
  %v278 = vld [vmem:[%s5] sm:$0xf]
  %v279 = vld [vmem:[%s5 + $0x4] sm:$0xf]
  %v280 = vld [vmem:[%s5 + $0x8] sm:$0xf]
  %v281 = vld [vmem:[%s5 + $0xc] sm:$0xf]
  %v282 = vld [vmem:[%s5 + $0x10] sm:$0xf]
  %v283 = vld [vmem:[%s5 + $0x14] sm:$0xf]
  %v284 = vld [vmem:[%s5 + $0x18] sm:$0xf]
  %v285 = vld [vmem:[%s5 + $0x1c] sm:$0xf]
  %v286 = vld [vmem:[%s5 + $0x20] sm:$0xf]
  %v287 = vld [vmem:[%s5 + $0x24] sm:$0xf]
  %v288 = vld [vmem:[%s5 + $0x28] sm:$0xf]
  %v289 = vld [vmem:[%s5 + $0x2c] sm:$0xf]
  %v290 = vld [vmem:[%s5 + $0x30] sm:$0xf]
  %v291 = vld [vmem:[%s5 + $0x34] sm:$0xf]
  %v292 = vld [vmem:[%s5 + $0x38] sm:$0xf]
  %v293 = vld [vmem:[%s5 + $0x3c] sm:$0xf]
  %v294 = vld [vmem:[%s6] sm:$0x1]
  %v296 = vlaneseq
  %v297 = vshrl.u32 %v296, 7
  %v298 = vsub.s32 0, %v297
  %v299 = vrot.slane %v294, %v298
  %v317 = vunpack.c.l.b16 %v278
  %v318 = vunpack.c.l.b16 %v279
  %v319 = vunpack.c.l.b16 %v280
  %v320 = vunpack.c.l.b16 %v281
  %v321 = vunpack.c.l.b16 %v282
  %v322 = vunpack.c.l.b16 %v283
  %v323 = vunpack.c.l.b16 %v284
  %v324 = vunpack.c.l.b16 %v285
  %v325 = vunpack.c.l.b16 %v286
  %v326 = vunpack.c.l.b16 %v287
  %v327 = vunpack.c.l.b16 %v288
  %v328 = vunpack.c.l.b16 %v289
  %v329 = vunpack.c.l.b16 %v290
  %v330 = vunpack.c.l.b16 %v291
  %v331 = vunpack.c.l.b16 %v292
  %v332 = vunpack.c.l.b16 %v293
  %v333 = vpack.c.b16 %v318, %v317
  %v334 = vpack.c.b16 %v320, %v319
  %v335 = vpack.c.b16 %v322, %v321
  %v336 = vpack.c.b16 %v324, %v323
  %v337 = vpack.c.b16 %v326, %v325
  %v338 = vpack.c.b16 %v328, %v327
  %v339 = vpack.c.b16 %v330, %v329
  %v340 = vpack.c.b16 %v332, %v331
  %349 = vmatprep.subr.bf16.mxu0 0
  %350 = vmatpush1.bf16.msra.mxu0 %v333
  %351 = vmatprep.subr.bf16.mxu0 0
  %352 = vmatpush1.bf16.msra.mxu0 %v334
  %353 = vmatprep.subr.bf16.mxu0 0
  %354 = vmatpush1.bf16.msra.mxu0 %v335
  %355 = vmatprep.subr.bf16.mxu0 0
  %356 = vmatpush1.bf16.msra.mxu0 %v336
  %357 = vmatprep.subr.bf16.mxu0 0
  %358 = vmatpush1.bf16.msra.mxu0 %v337
  %359 = vmatprep.subr.bf16.mxu0 0
  %360 = vmatpush1.bf16.msra.mxu0 %v338
  %361 = vmatprep.subr.bf16.mxu0 0
  %362 = vmatpush1.bf16.msra.mxu0 %v339
  %363 = vmatprep.subr.bf16.mxu0 0
  %364 = vmatpush1.bf16.msra.mxu0 %v340
  %365 = vmatprep.subr.bf16.mxu0 0
  %366 = vmatpush1.bf16.msra.mxu0 0
  %367 = vmatprep.subr.bf16.mxu0 0
  %368 = vmatpush1.bf16.msra.mxu0 0
  %369 = vmatprep.subr.bf16.mxu0 0
  %370 = vmatpush1.bf16.msra.mxu0 0
  %371 = vmatprep.subr.bf16.mxu0 0
  %372 = vmatpush1.bf16.msra.mxu0 0
  %373 = vmatprep.subr.bf16.mxu0 0
  %374 = vmatpush1.bf16.msra.mxu0 0
  %375 = vmatprep.subr.bf16.mxu0 0
  %376 = vmatpush1.bf16.msra.mxu0 0
  %377 = vmatprep.subr.bf16.mxu0 0
  %378 = vmatpush1.bf16.msra.mxu0 0
  %379 = vmatprep.subr.bf16.mxu0 0
  %380 = vmatpush1.bf16.msra.mxu0 0
  %381 = vmatprep.mubr.bf16.mxu0 0
  %382 = vmatmul.mubr.bf16.gmra.mrb[0].mxu0 %v269
  %v383 = vpop.f32.mrb[0].mxu0
  %v384 = vadd.f32 %v299, %v383
  %v385 = vpop.f32.mrb[0].mxu0
  %v386 = vpop.f32.mrb[0].mxu0
  %v387 = vadd.f32 %v299, %v386
  %v388 = vpop.f32.mrb[0].mxu0
  %389 = vmatprep.mubr.bf16.mxu0 0
  %390 = vmatmul.mubr.bf16.gmra.mrb[0].mxu0 %v270
  %v391 = vpop.f32.mrb[0].mxu0
  %v392 = vadd.f32 %v299, %v391
  %v393 = vpop.f32.mrb[0].mxu0
  %v394 = vpop.f32.mrb[0].mxu0
  %v395 = vadd.f32 %v299, %v394
  %v396 = vpop.f32.mrb[0].mxu0
  %397 = vmatprep.mubr.bf16.mxu0 0
  %398 = vmatmul.mubr.bf16.gmra.mrb[0].mxu0 %v271
  %v399 = vpop.f32.mrb[0].mxu0
  %v400 = vadd.f32 %v299, %v399
  %v401 = vpop.f32.mrb[0].mxu0
  %v402 = vpop.f32.mrb[0].mxu0
  %v403 = vadd.f32 %v299, %v402
  %v404 = vpop.f32.mrb[0].mxu0
  %405 = vmatprep.mubr.bf16.mxu0 0
  %406 = vmatmul.mubr.bf16.gmra.mrb[0].mxu0 %v272
  %v407 = vpop.f32.mrb[0].mxu0
  %v408 = vadd.f32 %v299, %v407
  %v409 = vpop.f32.mrb[0].mxu0
  %v410 = vpop.f32.mrb[0].mxu0
  %v411 = vadd.f32 %v299, %v410
  %v412 = vpop.f32.mrb[0].mxu0
  %413 = vmatprep.mubr.bf16.mxu0 0
  %414 = vmatmul.mubr.bf16.gmra.mrb[0].mxu0 %v273
  %v415 = vpop.f32.mrb[0].mxu0
  %v416 = vadd.f32 %v299, %v415
  %v417 = vpop.f32.mrb[0].mxu0
  %v418 = vpop.f32.mrb[0].mxu0
  %v419 = vadd.f32 %v299, %v418
  %v420 = vpop.f32.mrb[0].mxu0
  %421 = vmatprep.mubr.bf16.mxu0 0
  %422 = vmatmul.mubr.bf16.gmra.mrb[0].mxu0 %v274
  %v423 = vpop.f32.mrb[0].mxu0
  %v424 = vadd.f32 %v299, %v423
  %v425 = vpop.f32.mrb[0].mxu0
  %v426 = vpop.f32.mrb[0].mxu0
  %v427 = vadd.f32 %v299, %v426
  %v428 = vpop.f32.mrb[0].mxu0
  %429 = vmatprep.mubr.bf16.mxu0 0
  %430 = vmatmul.mubr.bf16.gmra.mrb[0].mxu0 %v275
  %v431 = vpop.f32.mrb[0].mxu0
  %v432 = vadd.f32 %v299, %v431
  %v433 = vpop.f32.mrb[0].mxu0
  %v434 = vpop.f32.mrb[0].mxu0
  %v435 = vadd.f32 %v299, %v434
  %v436 = vpop.f32.mrb[0].mxu0
  %437 = vmatprep.mubr.bf16.mxu0 0
  %438 = vmatmul.mubr.bf16.gmra.mrb[0].mxu0 %v276
  %v439 = vpop.f32.mrb[0].mxu0
  %v440 = vadd.f32 %v299, %v439
  %v441 = vpop.f32.mrb[0].mxu0
  %v442 = vpop.f32.mrb[0].mxu0
  %v443 = vadd.f32 %v299, %v442
  %v444 = vpop.f32.mrb[0].mxu0
  %445 = vmatprep.mubr.bf16.mxu0 0
  %446 = vmatmul.mubr.bf16.gmra.mrb[0].mxu0 %v277
  %v447 = vpop.f32.mrb[0].mxu0
  %v448 = vadd.f32 %v299, %v447
  %v449 = vpop.f32.mrb[0].mxu0
  %v450 = vpop.f32.mrb[0].mxu0
  %v451 = vpop.f32.mrb[0].mxu0
  %452 = vdwg.mxu0
  %v453 = vld [vmem:[%s1] sm:$0xff]
  %v454 = vld [vmem:[%s1 + $0x8] sm:$0xff]
  %v455 = vld [vmem:[%s1 + $0x10] sm:$0xff]
  %v456 = vld [vmem:[%s1 + $0x18] sm:$0xff]
  %v457 = vld [vmem:[%s1 + $0x20] sm:$0xff]
  %v458 = vld [vmem:[%s1 + $0x28] sm:$0xff]
  %v459 = vld [vmem:[%s1 + $0x30] sm:$0xff]
  %v460 = vld [vmem:[%s1 + $0x38] sm:$0xff]
  %v461 = vld [vmem:[%s1 + $0x40] sm:$0xff]
  %v462 = vld [vmem:[%s1 + $0x48] sm:$0xff]
  %v463 = vld [vmem:[%s1 + $0x50] sm:$0xff]
  %v464 = vld [vmem:[%s1 + $0x58] sm:$0xff]
  %v465 = vld [vmem:[%s1 + $0x60] sm:$0xff]
  %v466 = vld [vmem:[%s1 + $0x68] sm:$0xff]
  %v467 = vld [vmem:[%s1 + $0x70] sm:$0xff]
  %v468 = vld [vmem:[%s1 + $0x78] sm:$0xff]
  %v469 = vld [vmem:[%s1 + $0x80] sm:$0xff]
  %v470 = vpack.c.bf16 %v454, %v453
  %v471 = vpack.c.bf16 %v456, %v455
  %v472 = vpack.c.bf16 %v458, %v457
  %v473 = vpack.c.bf16 %v460, %v459
  %v474 = vpack.c.bf16 %v462, %v461
  %v475 = vpack.c.bf16 %v464, %v463
  %v476 = vpack.c.bf16 %v466, %v465
  %v477 = vpack.c.bf16 %v468, %v467
  %v478 = vpack.c.bf16 %v469, %v469
  %v479 = vld [vmem:[%s7] sm:$0x3]
  %v480 = vld [vmem:[%s8] sm:$0x1]
  %v482 = vlaneseq
  %v483 = vshrl.u32 %v482, 7
  %v484 = vsub.s32 0, %v483
  %v485 = vrot.slane %v480, %v484
  %vm487 = vcmask 31744
  %v489 = vsel %vm487, %v470, 0
  %v492 = vsel %vm487, %v471, 0
  %v495 = vsel %vm487, %v472, 0
  %v498 = vsel %vm487, %v473, 0
  %v501 = vsel %vm487, %v474, 0
  %v504 = vsel %vm487, %v475, 0
  %v507 = vsel %vm487, %v476, 0
  %v510 = vsel %vm487, %v477, 0
  %v513 = vsel %vm487, %v478, 0
  %vm515 = vcmask 1041408
  %v517 = vsel %vm515, %v479, 0
  %519 = vmatprep.subr.bf16.mxu0 0
  %520 = vmatpush1.bf16.msra.mxu0 %v517
  %521 = vmatprep.subr.bf16.mxu0 0
  %522 = vmatpush1.bf16.msra.mxu0 0
  %523 = vmatprep.subr.bf16.mxu0 0
  %524 = vmatpush1.bf16.msra.mxu0 0
  %525 = vmatprep.subr.bf16.mxu0 0
  %526 = vmatpush1.bf16.msra.mxu0 0
  %527 = vmatprep.subr.bf16.mxu0 0
  %528 = vmatpush1.bf16.msra.mxu0 0
  %529 = vmatprep.subr.bf16.mxu0 0
  %530 = vmatpush1.bf16.msra.mxu0 0
  %531 = vmatprep.subr.bf16.mxu0 0
  %532 = vmatpush1.bf16.msra.mxu0 0
  %533 = vmatprep.subr.bf16.mxu0 0
  %534 = vmatpush1.bf16.msra.mxu0 0
  %535 = vmatprep.subr.bf16.mxu0 0
  %536 = vmatpush1.bf16.msra.mxu0 0
  %537 = vmatprep.subr.bf16.mxu0 0
  %538 = vmatpush1.bf16.msra.mxu0 0
  %539 = vmatprep.subr.bf16.mxu0 0
  %540 = vmatpush1.bf16.msra.mxu0 0
  %541 = vmatprep.subr.bf16.mxu0 0
  %542 = vmatpush1.bf16.msra.mxu0 0
  %543 = vmatprep.subr.bf16.mxu0 0
  %544 = vmatpush1.bf16.msra.mxu0 0
  %545 = vmatprep.subr.bf16.mxu0 0
  %546 = vmatpush1.bf16.msra.mxu0 0
  %547 = vmatprep.subr.bf16.mxu0 0
  %548 = vmatpush1.bf16.msra.mxu0 0
  %549 = vmatprep.subr.bf16.mxu0 0
  %550 = vmatpush1.bf16.msra.mxu0 0
  %551 = vmatprep.mubr.bf16.mxu0 0
  %552 = vmatmul.mubr.bf16.gmra.mrb[0].mxu0 %v489
  %v553 = vpop.f32.mrb[0].mxu0
  %v554 = vadd.f32 %v485, %v553
  %v555 = vpop.f32.mrb[0].mxu0
  %v556 = vpop.f32.mrb[0].mxu0
  %v557 = vadd.f32 %v485, %v556
  %v558 = vpop.f32.mrb[0].mxu0
  %559 = vmatprep.mubr.bf16.mxu0 0
  %560 = vmatmul.mubr.bf16.gmra.mrb[0].mxu0 %v492
  %v561 = vpop.f32.mrb[0].mxu0
  %v562 = vadd.f32 %v485, %v561
  %v563 = vpop.f32.mrb[0].mxu0
  %v564 = vpop.f32.mrb[0].mxu0
  %v565 = vadd.f32 %v485, %v564
  %v566 = vpop.f32.mrb[0].mxu0
  %567 = vmatprep.mubr.bf16.mxu0 0
  %568 = vmatmul.mubr.bf16.gmra.mrb[0].mxu0 %v495
  %v569 = vpop.f32.mrb[0].mxu0
  %v570 = vadd.f32 %v485, %v569
  %v571 = vpop.f32.mrb[0].mxu0
  %v572 = vpop.f32.mrb[0].mxu0
  %v573 = vadd.f32 %v485, %v572
  %v574 = vpop.f32.mrb[0].mxu0
  %575 = vmatprep.mubr.bf16.mxu0 0
  %576 = vmatmul.mubr.bf16.gmra.mrb[0].mxu0 %v498
  %v577 = vpop.f32.mrb[0].mxu0
  %v578 = vadd.f32 %v485, %v577
  %v579 = vpop.f32.mrb[0].mxu0
  %v580 = vpop.f32.mrb[0].mxu0
  %v581 = vadd.f32 %v485, %v580
  %v582 = vpop.f32.mrb[0].mxu0
  %583 = vmatprep.mubr.bf16.mxu0 0
  %584 = vmatmul.mubr.bf16.gmra.mrb[0].mxu0 %v501
  %v585 = vpop.f32.mrb[0].mxu0
  %v586 = vadd.f32 %v485, %v585
  %v587 = vpop.f32.mrb[0].mxu0
  %v588 = vpop.f32.mrb[0].mxu0
  %v589 = vadd.f32 %v485, %v588
  %v590 = vpop.f32.mrb[0].mxu0
  %591 = vmatprep.mubr.bf16.mxu0 0
  %592 = vmatmul.mubr.bf16.gmra.mrb[0].mxu0 %v504
  %v593 = vpop.f32.mrb[0].mxu0
  %v594 = vadd.f32 %v485, %v593
  %v595 = vpop.f32.mrb[0].mxu0
  %v596 = vpop.f32.mrb[0].mxu0
  %v597 = vadd.f32 %v485, %v596
  %v598 = vpop.f32.mrb[0].mxu0
  %599 = vmatprep.mubr.bf16.mxu0 0
  %600 = vmatmul.mubr.bf16.gmra.mrb[0].mxu0 %v507
  %v601 = vpop.f32.mrb[0].mxu0
  %v602 = vadd.f32 %v485, %v601
  %v603 = vpop.f32.mrb[0].mxu0
  %v604 = vpop.f32.mrb[0].mxu0
  %v605 = vadd.f32 %v485, %v604
  %v606 = vpop.f32.mrb[0].mxu0
  %607 = vmatprep.mubr.bf16.mxu0 0
  %608 = vmatmul.mubr.bf16.gmra.mrb[0].mxu0 %v510
  %v609 = vpop.f32.mrb[0].mxu0
  %v610 = vadd.f32 %v485, %v609
  %v611 = vpop.f32.mrb[0].mxu0
  %v612 = vpop.f32.mrb[0].mxu0
  %v613 = vadd.f32 %v485, %v612
  %v614 = vpop.f32.mrb[0].mxu0
  %615 = vmatprep.mubr.bf16.mxu0 0
  %616 = vmatmul.mubr.bf16.gmra.mrb[0].mxu0 %v513
  %v617 = vpop.f32.mrb[0].mxu0
  %v618 = vadd.f32 %v485, %v617
  %v619 = vpop.f32.mrb[0].mxu0
  %v620 = vpop.f32.mrb[0].mxu0
  %v621 = vpop.f32.mrb[0].mxu0
  %622 = vdwg.mxu0
  %v623 = vmax.f32 %v554, 0.0
  %v624 = vmax.f32 %v557, 0.0
  %v625 = vmax.f32 %v562, 0.0
  %v626 = vmax.f32 %v565, 0.0
  %v627 = vmax.f32 %v570, 0.0
  %v628 = vmax.f32 %v573, 0.0
  %v629 = vmax.f32 %v578, 0.0
  %v630 = vmax.f32 %v581, 0.0
  %v631 = vmax.f32 %v586, 0.0
  %v632 = vmax.f32 %v589, 0.0
  %v633 = vmax.f32 %v594, 0.0
  %v634 = vmax.f32 %v597, 0.0
  %v635 = vmax.f32 %v602, 0.0
  %v636 = vmax.f32 %v605, 0.0
  %v637 = vmax.f32 %v610, 0.0
  %v638 = vmax.f32 %v613, 0.0
  %v639 = vmax.f32 %v618, 0.0
  %v640 = vpack.c.bf16 %v624, %v623
  %v641 = vpack.c.bf16 %v626, %v625
  %v642 = vpack.c.bf16 %v628, %v627
  %v643 = vpack.c.bf16 %v630, %v629
  %v644 = vpack.c.bf16 %v632, %v631
  %v645 = vpack.c.bf16 %v634, %v633
  %v646 = vpack.c.bf16 %v636, %v635
  %v647 = vpack.c.bf16 %v638, %v637
  %v648 = vpack.c.bf16 %v639, %v639
  %v649 = vld [vmem:[%s9] sm:$0xf]
  %v650 = vld [vmem:[%s9 + $0x4] sm:$0xf]
  %v651 = vld [vmem:[%s9 + $0x8] sm:$0xf]
  %v652 = vld [vmem:[%s9 + $0xc] sm:$0xf]
  %v653 = vld [vmem:[%s9 + $0x10] sm:$0xf]
  %v654 = vld [vmem:[%s9 + $0x14] sm:$0xf]
  %v655 = vld [vmem:[%s9 + $0x18] sm:$0xf]
  %v656 = vld [vmem:[%s9 + $0x1c] sm:$0xf]
  %v657 = vld [vmem:[%s10] sm:$0x1]
  %v659 = vlaneseq
  %v660 = vshrl.u32 %v659, 7
  %v661 = vsub.s32 0, %v660
  %v662 = vrot.slane %v657, %v661
  %v672 = vunpack.c.l.b16 %v649
  %v673 = vunpack.c.l.b16 %v650
  %v674 = vunpack.c.l.b16 %v651
  %v675 = vunpack.c.l.b16 %v652
  %v676 = vunpack.c.l.b16 %v653
  %v677 = vunpack.c.l.b16 %v654
  %v678 = vunpack.c.l.b16 %v655
  %v679 = vunpack.c.l.b16 %v656
  %v680 = vpack.c.b16 %v673, %v672
  %v681 = vpack.c.b16 %v675, %v674
  %v682 = vpack.c.b16 %v677, %v676
  %v683 = vpack.c.b16 %v679, %v678
  %vm688 = vcmask 523264
  %v690 = vsel %vm688, %v640, 0
  %v693 = vsel %vm688, %v641, 0
  %v696 = vsel %vm688, %v642, 0
  %v699 = vsel %vm688, %v643, 0
  %v702 = vsel %vm688, %v644, 0
  %v705 = vsel %vm688, %v645, 0
  %v708 = vsel %vm688, %v646, 0
  %v711 = vsel %vm688, %v647, 0
  %v714 = vsel %vm688, %v648, 0
  %716 = vmatprep.subr.bf16.mxu0 0
  %717 = vmatpush1.bf16.msra.mxu0 %v680
  %718 = vmatprep.subr.bf16.mxu0 0
  %719 = vmatpush1.bf16.msra.mxu0 %v681
  %720 = vmatprep.subr.bf16.mxu0 0
  %721 = vmatpush1.bf16.msra.mxu0 %v682
  %722 = vmatprep.subr.bf16.mxu0 0
  %723 = vmatpush1.bf16.msra.mxu0 %v683
  %724 = vmatprep.subr.bf16.mxu0 0
  %725 = vmatpush1.bf16.msra.mxu0 0
  %726 = vmatprep.subr.bf16.mxu0 0
  %727 = vmatpush1.bf16.msra.mxu0 0
  %728 = vmatprep.subr.bf16.mxu0 0
  %729 = vmatpush1.bf16.msra.mxu0 0
  %730 = vmatprep.subr.bf16.mxu0 0
  %731 = vmatpush1.bf16.msra.mxu0 0
  %732 = vmatprep.subr.bf16.mxu0 0
  %733 = vmatpush1.bf16.msra.mxu0 0
  %734 = vmatprep.subr.bf16.mxu0 0
  %735 = vmatpush1.bf16.msra.mxu0 0
  %736 = vmatprep.subr.bf16.mxu0 0
  %737 = vmatpush1.bf16.msra.mxu0 0
  %738 = vmatprep.subr.bf16.mxu0 0
  %739 = vmatpush1.bf16.msra.mxu0 0
  %740 = vmatprep.subr.bf16.mxu0 0
  %741 = vmatpush1.bf16.msra.mxu0 0
  %742 = vmatprep.subr.bf16.mxu0 0
  %743 = vmatpush1.bf16.msra.mxu0 0
  %744 = vmatprep.subr.bf16.mxu0 0
  %745 = vmatpush1.bf16.msra.mxu0 0
  %746 = vmatprep.subr.bf16.mxu0 0
  %747 = vmatpush1.bf16.msra.mxu0 0
  %748 = vmatprep.mubr.bf16.mxu0 0
  %749 = vmatmul.mubr.bf16.gmra.mrb[0].mxu0 %v690
  %v750 = vpop.f32.mrb[0].mxu0
  %v751 = vadd.f32 %v662, %v750
  %v752 = vpop.f32.mrb[0].mxu0
  %v753 = vpop.f32.mrb[0].mxu0
  %v754 = vadd.f32 %v662, %v753
  %v755 = vpop.f32.mrb[0].mxu0
  %756 = vmatprep.mubr.bf16.mxu0 0
  %757 = vmatmul.mubr.bf16.gmra.mrb[0].mxu0 %v693
  %v758 = vpop.f32.mrb[0].mxu0
  %v759 = vadd.f32 %v662, %v758
  %v760 = vpop.f32.mrb[0].mxu0
  %v761 = vpop.f32.mrb[0].mxu0
  %v762 = vadd.f32 %v662, %v761
  %v763 = vpop.f32.mrb[0].mxu0
  %764 = vmatprep.mubr.bf16.mxu0 0
  %765 = vmatmul.mubr.bf16.gmra.mrb[0].mxu0 %v696
  %v766 = vpop.f32.mrb[0].mxu0
  %v767 = vadd.f32 %v662, %v766
  %v768 = vpop.f32.mrb[0].mxu0
  %v769 = vpop.f32.mrb[0].mxu0
  %v770 = vadd.f32 %v662, %v769
  %v771 = vpop.f32.mrb[0].mxu0
  %772 = vmatprep.mubr.bf16.mxu0 0
  %773 = vmatmul.mubr.bf16.gmra.mrb[0].mxu0 %v699
  %v774 = vpop.f32.mrb[0].mxu0
  %v775 = vadd.f32 %v662, %v774
  %v776 = vpop.f32.mrb[0].mxu0
  %v777 = vpop.f32.mrb[0].mxu0
  %v778 = vadd.f32 %v662, %v777
  %v779 = vpop.f32.mrb[0].mxu0
  %780 = vmatprep.mubr.bf16.mxu0 0
  %781 = vmatmul.mubr.bf16.gmra.mrb[0].mxu0 %v702
  %v782 = vpop.f32.mrb[0].mxu0
  %v783 = vadd.f32 %v662, %v782
  %v784 = vpop.f32.mrb[0].mxu0
  %v785 = vpop.f32.mrb[0].mxu0
  %v786 = vadd.f32 %v662, %v785
  %v787 = vpop.f32.mrb[0].mxu0
  %788 = vmatprep.mubr.bf16.mxu0 0
  %789 = vmatmul.mubr.bf16.gmra.mrb[0].mxu0 %v705
  %v790 = vpop.f32.mrb[0].mxu0
  %v791 = vadd.f32 %v662, %v790
  %v792 = vpop.f32.mrb[0].mxu0
  %v793 = vpop.f32.mrb[0].mxu0
  %v794 = vadd.f32 %v662, %v793
  %v795 = vpop.f32.mrb[0].mxu0
  %796 = vmatprep.mubr.bf16.mxu0 0
  %797 = vmatmul.mubr.bf16.gmra.mrb[0].mxu0 %v708
  %v798 = vpop.f32.mrb[0].mxu0
  %v799 = vadd.f32 %v662, %v798
  %v800 = vpop.f32.mrb[0].mxu0
  %v801 = vpop.f32.mrb[0].mxu0
  %v802 = vadd.f32 %v662, %v801
  %v803 = vpop.f32.mrb[0].mxu0
  %804 = vmatprep.mubr.bf16.mxu0 0
  %805 = vmatmul.mubr.bf16.gmra.mrb[0].mxu0 %v711
  %v806 = vpop.f32.mrb[0].mxu0
  %v807 = vadd.f32 %v662, %v806
  %v808 = vpop.f32.mrb[0].mxu0
  %v809 = vpop.f32.mrb[0].mxu0
  %v810 = vadd.f32 %v662, %v809
  %v811 = vpop.f32.mrb[0].mxu0
  %812 = vmatprep.mubr.bf16.mxu0 0
  %813 = vmatmul.mubr.bf16.gmra.mrb[0].mxu0 %v714
  %v814 = vpop.f32.mrb[0].mxu0
  %v815 = vadd.f32 %v662, %v814
  %v816 = vpop.f32.mrb[0].mxu0
  %v817 = vpop.f32.mrb[0].mxu0
  %v818 = vpop.f32.mrb[0].mxu0
  %819 = vdwg.mxu0
  %v820 = vld [vmem:[%s2] sm:$0xff]
  %v821 = vld [vmem:[%s2 + $0x8] sm:$0xff]
  %v822 = vld [vmem:[%s2 + $0x10] sm:$0xff]
  %v823 = vld [vmem:[%s2 + $0x18] sm:$0xff]
  %v824 = vld [vmem:[%s2 + $0x20] sm:$0xff]
  %v825 = vld [vmem:[%s2 + $0x28] sm:$0xff]
  %v826 = vld [vmem:[%s2 + $0x30] sm:$0xff]
  %v827 = vld [vmem:[%s2 + $0x38] sm:$0xff]
  %v828 = vld [vmem:[%s2 + $0x40] sm:$0xff]
  %v829 = vld [vmem:[%s2 + $0x48] sm:$0xff]
  %v830 = vld [vmem:[%s2 + $0x50] sm:$0xff]
  %v831 = vld [vmem:[%s2 + $0x58] sm:$0xff]
  %v832 = vld [vmem:[%s2 + $0x60] sm:$0xff]
  %v833 = vld [vmem:[%s2 + $0x68] sm:$0xff]
  %v834 = vld [vmem:[%s2 + $0x70] sm:$0xff]
  %v835 = vld [vmem:[%s2 + $0x78] sm:$0xff]
  %v836 = vld [vmem:[%s2 + $0x80] sm:$0xff]
  %v837 = vpack.c.bf16 %v821, %v820
  %v838 = vpack.c.bf16 %v823, %v822
  %v839 = vpack.c.bf16 %v825, %v824
  %v840 = vpack.c.bf16 %v827, %v826
  %v841 = vpack.c.bf16 %v829, %v828
  %v842 = vpack.c.bf16 %v831, %v830
  %v843 = vpack.c.bf16 %v833, %v832
  %v844 = vpack.c.bf16 %v835, %v834
  %v845 = vpack.c.bf16 %v836, %v836
  %v846 = vld [vmem:[%s11] sm:$0xf]
  %v847 = vld [vmem:[%s11 + $0x4] sm:$0xf]
  %v848 = vld [vmem:[%s11 + $0x8] sm:$0xf]
  %v849 = vld [vmem:[%s11 + $0xc] sm:$0xf]
  %v850 = vld [vmem:[%s11 + $0x10] sm:$0xf]
  %v851 = vld [vmem:[%s11 + $0x14] sm:$0xf]
  %v852 = vld [vmem:[%s11 + $0x18] sm:$0xf]
  %v853 = vld [vmem:[%s11 + $0x1c] sm:$0xf]
  %v854 = vld [vmem:[%s11 + $0x20] sm:$0xf]
  %v855 = vld [vmem:[%s11 + $0x24] sm:$0xf]
  %v856 = vld [vmem:[%s11 + $0x28] sm:$0xf]
  %v857 = vld [vmem:[%s11 + $0x2c] sm:$0xf]
  %v858 = vld [vmem:[%s11 + $0x30] sm:$0xf]
  %v859 = vld [vmem:[%s11 + $0x34] sm:$0xf]
  %v860 = vld [vmem:[%s11 + $0x38] sm:$0xf]
  %v861 = vld [vmem:[%s11 + $0x3c] sm:$0xf]
  %v862 = vld [vmem:[%s12] sm:$0x1]
  %v864 = vlaneseq
  %v865 = vshrl.u32 %v864, 7
  %v866 = vsub.s32 0, %v865
  %v867 = vrot.slane %v862, %v866
  %v885 = vunpack.c.l.b16 %v846
  %v886 = vunpack.c.l.b16 %v847
  %v887 = vunpack.c.l.b16 %v848
  %v888 = vunpack.c.l.b16 %v849
  %v889 = vunpack.c.l.b16 %v850
  %v890 = vunpack.c.l.b16 %v851
  %v891 = vunpack.c.l.b16 %v852
  %v892 = vunpack.c.l.b16 %v853
  %v893 = vunpack.c.l.b16 %v854
  %v894 = vunpack.c.l.b16 %v855
  %v895 = vunpack.c.l.b16 %v856
  %v896 = vunpack.c.l.b16 %v857
  %v897 = vunpack.c.l.b16 %v858
  %v898 = vunpack.c.l.b16 %v859
  %v899 = vunpack.c.l.b16 %v860
  %v900 = vunpack.c.l.b16 %v861
  %v901 = vpack.c.b16 %v886, %v885
  %v902 = vpack.c.b16 %v888, %v887
  %v903 = vpack.c.b16 %v890, %v889
  %v904 = vpack.c.b16 %v892, %v891
  %v905 = vpack.c.b16 %v894, %v893
  %v906 = vpack.c.b16 %v896, %v895
  %v907 = vpack.c.b16 %v898, %v897
  %v908 = vpack.c.b16 %v900, %v899
  %917 = vmatprep.subr.bf16.mxu0 0
  %918 = vmatpush1.bf16.msra.mxu0 %v901
  %919 = vmatprep.subr.bf16.mxu0 0
  %920 = vmatpush1.bf16.msra.mxu0 %v902
  %921 = vmatprep.subr.bf16.mxu0 0
  %922 = vmatpush1.bf16.msra.mxu0 %v903
  %923 = vmatprep.subr.bf16.mxu0 0
  %924 = vmatpush1.bf16.msra.mxu0 %v904
  %925 = vmatprep.subr.bf16.mxu0 0
  %926 = vmatpush1.bf16.msra.mxu0 %v905
  %927 = vmatprep.subr.bf16.mxu0 0
  %928 = vmatpush1.bf16.msra.mxu0 %v906
  %929 = vmatprep.subr.bf16.mxu0 0
  %930 = vmatpush1.bf16.msra.mxu0 %v907
  %931 = vmatprep.subr.bf16.mxu0 0
  %932 = vmatpush1.bf16.msra.mxu0 %v908
  %933 = vmatprep.subr.bf16.mxu0 0
  %934 = vmatpush1.bf16.msra.mxu0 0
  %935 = vmatprep.subr.bf16.mxu0 0
  %936 = vmatpush1.bf16.msra.mxu0 0
  %937 = vmatprep.subr.bf16.mxu0 0
  %938 = vmatpush1.bf16.msra.mxu0 0
  %939 = vmatprep.subr.bf16.mxu0 0
  %940 = vmatpush1.bf16.msra.mxu0 0
  %941 = vmatprep.subr.bf16.mxu0 0
  %942 = vmatpush1.bf16.msra.mxu0 0
  %943 = vmatprep.subr.bf16.mxu0 0
  %944 = vmatpush1.bf16.msra.mxu0 0
  %945 = vmatprep.subr.bf16.mxu0 0
  %946 = vmatpush1.bf16.msra.mxu0 0
  %947 = vmatprep.subr.bf16.mxu0 0
  %948 = vmatpush1.bf16.msra.mxu0 0
  %949 = vmatprep.mubr.bf16.mxu0 0
  %950 = vmatmul.mubr.bf16.gmra.mrb[0].mxu0 %v837
  %v951 = vpop.f32.mrb[0].mxu0
  %v952 = vadd.f32 %v867, %v951
  %v953 = vpop.f32.mrb[0].mxu0
  %v954 = vpop.f32.mrb[0].mxu0
  %v955 = vadd.f32 %v867, %v954
  %v956 = vpop.f32.mrb[0].mxu0
  %957 = vmatprep.mubr.bf16.mxu0 0
  %958 = vmatmul.mubr.bf16.gmra.mrb[0].mxu0 %v838
  %v959 = vpop.f32.mrb[0].mxu0
  %v960 = vadd.f32 %v867, %v959
  %v961 = vpop.f32.mrb[0].mxu0
  %v962 = vpop.f32.mrb[0].mxu0
  %v963 = vadd.f32 %v867, %v962
  %v964 = vpop.f32.mrb[0].mxu0
  %965 = vmatprep.mubr.bf16.mxu0 0
  %966 = vmatmul.mubr.bf16.gmra.mrb[0].mxu0 %v839
  %v967 = vpop.f32.mrb[0].mxu0
  %v968 = vadd.f32 %v867, %v967
  %v969 = vpop.f32.mrb[0].mxu0
  %v970 = vpop.f32.mrb[0].mxu0
  %v971 = vadd.f32 %v867, %v970
  %v972 = vpop.f32.mrb[0].mxu0
  %973 = vmatprep.mubr.bf16.mxu0 0
  %974 = vmatmul.mubr.bf16.gmra.mrb[0].mxu0 %v840
  %v975 = vpop.f32.mrb[0].mxu0
  %v976 = vadd.f32 %v867, %v975
  %v977 = vpop.f32.mrb[0].mxu0
  %v978 = vpop.f32.mrb[0].mxu0
  %v979 = vadd.f32 %v867, %v978
  %v980 = vpop.f32.mrb[0].mxu0
  %981 = vmatprep.mubr.bf16.mxu0 0
  %982 = vmatmul.mubr.bf16.gmra.mrb[0].mxu0 %v841
  %v983 = vpop.f32.mrb[0].mxu0
  %v984 = vadd.f32 %v867, %v983
  %v985 = vpop.f32.mrb[0].mxu0
  %v986 = vpop.f32.mrb[0].mxu0
  %v987 = vadd.f32 %v867, %v986
  %v988 = vpop.f32.mrb[0].mxu0
  %989 = vmatprep.mubr.bf16.mxu0 0
  %990 = vmatmul.mubr.bf16.gmra.mrb[0].mxu0 %v842
  %v991 = vpop.f32.mrb[0].mxu0
  %v992 = vadd.f32 %v867, %v991
  %v993 = vpop.f32.mrb[0].mxu0
  %v994 = vpop.f32.mrb[0].mxu0
  %v995 = vadd.f32 %v867, %v994
  %v996 = vpop.f32.mrb[0].mxu0
  %997 = vmatprep.mubr.bf16.mxu0 0
  %998 = vmatmul.mubr.bf16.gmra.mrb[0].mxu0 %v843
  %v999 = vpop.f32.mrb[0].mxu0
  %v1000 = vadd.f32 %v867, %v999
  %v1001 = vpop.f32.mrb[0].mxu0
  %v1002 = vpop.f32.mrb[0].mxu0
  %v1003 = vadd.f32 %v867, %v1002
  %v1004 = vpop.f32.mrb[0].mxu0
  %1005 = vmatprep.mubr.bf16.mxu0 0
  %1006 = vmatmul.mubr.bf16.gmra.mrb[0].mxu0 %v844
  %v1007 = vpop.f32.mrb[0].mxu0
  %v1008 = vadd.f32 %v867, %v1007
  %v1009 = vpop.f32.mrb[0].mxu0
  %v1010 = vpop.f32.mrb[0].mxu0
  %v1011 = vadd.f32 %v867, %v1010
  %v1012 = vpop.f32.mrb[0].mxu0
  %1013 = vmatprep.mubr.bf16.mxu0 0
  %1014 = vmatmul.mubr.bf16.gmra.mrb[0].mxu0 %v845
  %v1015 = vpop.f32.mrb[0].mxu0
  %v1016 = vadd.f32 %v867, %v1015
  %v1017 = vpop.f32.mrb[0].mxu0
  %v1018 = vpop.f32.mrb[0].mxu0
  %v1019 = vpop.f32.mrb[0].mxu0
  %1020 = vdwg.mxu0
  %v1021 = vmax.f32 %v952, 0.0
  %v1022 = vmax.f32 %v955, 0.0
  %v1023 = vmax.f32 %v960, 0.0
  %v1024 = vmax.f32 %v963, 0.0
  %v1025 = vmax.f32 %v968, 0.0
  %v1026 = vmax.f32 %v971, 0.0
  %v1027 = vmax.f32 %v976, 0.0
  %v1028 = vmax.f32 %v979, 0.0
  %v1029 = vmax.f32 %v984, 0.0
  %v1030 = vmax.f32 %v987, 0.0
  %v1031 = vmax.f32 %v992, 0.0
  %v1032 = vmax.f32 %v995, 0.0
  %v1033 = vmax.f32 %v1000, 0.0
  %v1034 = vmax.f32 %v1003, 0.0
  %v1035 = vmax.f32 %v1008, 0.0
  %v1036 = vmax.f32 %v1011, 0.0
  %v1037 = vmax.f32 %v1016, 0.0
  %v1038 = vpack.c.bf16 %v1022, %v1021
  %v1039 = vpack.c.bf16 %v1024, %v1023
  %v1040 = vpack.c.bf16 %v1026, %v1025
  %v1041 = vpack.c.bf16 %v1028, %v1027
  %v1042 = vpack.c.bf16 %v1030, %v1029
  %v1043 = vpack.c.bf16 %v1032, %v1031
  %v1044 = vpack.c.bf16 %v1034, %v1033
  %v1045 = vpack.c.bf16 %v1036, %v1035
  %v1046 = vpack.c.bf16 %v1037, %v1037
  %v1047 = vld [vmem:[%s13] sm:$0xf]
  %v1048 = vld [vmem:[%s13 + $0x4] sm:$0xf]
  %v1049 = vld [vmem:[%s13 + $0x8] sm:$0xf]
  %v1050 = vld [vmem:[%s13 + $0xc] sm:$0xf]
  %v1051 = vld [vmem:[%s13 + $0x10] sm:$0xf]
  %v1052 = vld [vmem:[%s13 + $0x14] sm:$0xf]
  %v1053 = vld [vmem:[%s13 + $0x18] sm:$0xf]
  %v1054 = vld [vmem:[%s13 + $0x1c] sm:$0xf]
  %v1055 = vld [vmem:[%s14] sm:$0x1]
  %v1057 = vlaneseq
  %v1058 = vshrl.u32 %v1057, 7
  %v1059 = vsub.s32 0, %v1058
  %v1060 = vrot.slane %v1055, %v1059
  %v1070 = vunpack.c.l.b16 %v1047
  %v1071 = vunpack.c.l.b16 %v1048
  %v1072 = vunpack.c.l.b16 %v1049
  %v1073 = vunpack.c.l.b16 %v1050
  %v1074 = vunpack.c.l.b16 %v1051
  %v1075 = vunpack.c.l.b16 %v1052
  %v1076 = vunpack.c.l.b16 %v1053
  %v1077 = vunpack.c.l.b16 %v1054
  %v1078 = vpack.c.b16 %v1071, %v1070
  %v1079 = vpack.c.b16 %v1073, %v1072
  %v1080 = vpack.c.b16 %v1075, %v1074
  %v1081 = vpack.c.b16 %v1077, %v1076
  %v1087 = vsel %vm688, %v1038, 0
  %v1090 = vsel %vm688, %v1039, 0
  %v1093 = vsel %vm688, %v1040, 0
  %v1096 = vsel %vm688, %v1041, 0
  %v1099 = vsel %vm688, %v1042, 0
  %v1102 = vsel %vm688, %v1043, 0
  %v1105 = vsel %vm688, %v1044, 0
  %v1108 = vsel %vm688, %v1045, 0
  %v1111 = vsel %vm688, %v1046, 0
  %1113 = vmatprep.subr.bf16.mxu0 0
  %1114 = vmatpush1.bf16.msra.mxu0 %v1078
  %1115 = vmatprep.subr.bf16.mxu0 0
  %1116 = vmatpush1.bf16.msra.mxu0 %v1079
  %1117 = vmatprep.subr.bf16.mxu0 0
  %1118 = vmatpush1.bf16.msra.mxu0 %v1080
  %1119 = vmatprep.subr.bf16.mxu0 0
  %1120 = vmatpush1.bf16.msra.mxu0 %v1081
  %1121 = vmatprep.subr.bf16.mxu0 0
  %1122 = vmatpush1.bf16.msra.mxu0 0
  %1123 = vmatprep.subr.bf16.mxu0 0
  %1124 = vmatpush1.bf16.msra.mxu0 0
  %1125 = vmatprep.subr.bf16.mxu0 0
  %1126 = vmatpush1.bf16.msra.mxu0 0
  %1127 = vmatprep.subr.bf16.mxu0 0
  %1128 = vmatpush1.bf16.msra.mxu0 0
  %1129 = vmatprep.subr.bf16.mxu0 0
  %1130 = vmatpush1.bf16.msra.mxu0 0
  %1131 = vmatprep.subr.bf16.mxu0 0
  %1132 = vmatpush1.bf16.msra.mxu0 0
  %1133 = vmatprep.subr.bf16.mxu0 0
  %1134 = vmatpush1.bf16.msra.mxu0 0
  %1135 = vmatprep.subr.bf16.mxu0 0
  %1136 = vmatpush1.bf16.msra.mxu0 0
  %1137 = vmatprep.subr.bf16.mxu0 0
  %1138 = vmatpush1.bf16.msra.mxu0 0
  %1139 = vmatprep.subr.bf16.mxu0 0
  %1140 = vmatpush1.bf16.msra.mxu0 0
  %1141 = vmatprep.subr.bf16.mxu0 0
  %1142 = vmatpush1.bf16.msra.mxu0 0
  %1143 = vmatprep.subr.bf16.mxu0 0
  %1144 = vmatpush1.bf16.msra.mxu0 0
  %1145 = vmatprep.mubr.bf16.mxu0 0
  %1146 = vmatmul.mubr.bf16.gmra.mrb[0].mxu0 %v1087
  %v1147 = vpop.f32.mrb[0].mxu0
  %v1148 = vadd.f32 %v1060, %v1147
  %v1149 = vpop.f32.mrb[0].mxu0
  %v1150 = vpop.f32.mrb[0].mxu0
  %v1151 = vadd.f32 %v1060, %v1150
  %v1152 = vpop.f32.mrb[0].mxu0
  %1153 = vmatprep.mubr.bf16.mxu0 0
  %1154 = vmatmul.mubr.bf16.gmra.mrb[0].mxu0 %v1090
  %v1155 = vpop.f32.mrb[0].mxu0
  %v1156 = vadd.f32 %v1060, %v1155
  %v1157 = vpop.f32.mrb[0].mxu0
  %v1158 = vpop.f32.mrb[0].mxu0
  %v1159 = vadd.f32 %v1060, %v1158
  %v1160 = vpop.f32.mrb[0].mxu0
  %1161 = vmatprep.mubr.bf16.mxu0 0
  %1162 = vmatmul.mubr.bf16.gmra.mrb[0].mxu0 %v1093
  %v1163 = vpop.f32.mrb[0].mxu0
  %v1164 = vadd.f32 %v1060, %v1163
  %v1165 = vpop.f32.mrb[0].mxu0
  %v1166 = vpop.f32.mrb[0].mxu0
  %v1167 = vadd.f32 %v1060, %v1166
  %v1168 = vpop.f32.mrb[0].mxu0
  %1169 = vmatprep.mubr.bf16.mxu0 0
  %1170 = vmatmul.mubr.bf16.gmra.mrb[0].mxu0 %v1096
  %v1171 = vpop.f32.mrb[0].mxu0
  %v1172 = vadd.f32 %v1060, %v1171
  %v1173 = vpop.f32.mrb[0].mxu0
  %v1174 = vpop.f32.mrb[0].mxu0
  %v1175 = vadd.f32 %v1060, %v1174
  %v1176 = vpop.f32.mrb[0].mxu0
  %1177 = vmatprep.mubr.bf16.mxu0 0
  %1178 = vmatmul.mubr.bf16.gmra.mrb[0].mxu0 %v1099
  %v1179 = vpop.f32.mrb[0].mxu0
  %v1180 = vadd.f32 %v1060, %v1179
  %v1181 = vpop.f32.mrb[0].mxu0
  %v1182 = vpop.f32.mrb[0].mxu0
  %v1183 = vadd.f32 %v1060, %v1182
  %v1184 = vpop.f32.mrb[0].mxu0
  %1185 = vmatprep.mubr.bf16.mxu0 0
  %1186 = vmatmul.mubr.bf16.gmra.mrb[0].mxu0 %v1102
  %v1187 = vpop.f32.mrb[0].mxu0
  %v1188 = vadd.f32 %v1060, %v1187
  %v1189 = vpop.f32.mrb[0].mxu0
  %v1190 = vpop.f32.mrb[0].mxu0
  %v1191 = vadd.f32 %v1060, %v1190
  %v1192 = vpop.f32.mrb[0].mxu0
  %1193 = vmatprep.mubr.bf16.mxu0 0
  %1194 = vmatmul.mubr.bf16.gmra.mrb[0].mxu0 %v1105
  %v1195 = vpop.f32.mrb[0].mxu0
  %v1196 = vadd.f32 %v1060, %v1195
  %v1197 = vpop.f32.mrb[0].mxu0
  %v1198 = vpop.f32.mrb[0].mxu0
  %v1199 = vadd.f32 %v1060, %v1198
  %v1200 = vpop.f32.mrb[0].mxu0
  %1201 = vmatprep.mubr.bf16.mxu0 0
  %1202 = vmatmul.mubr.bf16.gmra.mrb[0].mxu0 %v1108
  %v1203 = vpop.f32.mrb[0].mxu0
  %v1204 = vadd.f32 %v1060, %v1203
  %v1205 = vpop.f32.mrb[0].mxu0
  %v1206 = vpop.f32.mrb[0].mxu0
  %v1207 = vadd.f32 %v1060, %v1206
  %v1208 = vpop.f32.mrb[0].mxu0
  %1209 = vmatprep.mubr.bf16.mxu0 0
  %1210 = vmatmul.mubr.bf16.gmra.mrb[0].mxu0 %v1111
  %v1211 = vpop.f32.mrb[0].mxu0
  %v1212 = vadd.f32 %v1060, %v1211
  %v1213 = vpop.f32.mrb[0].mxu0
  %v1214 = vpop.f32.mrb[0].mxu0
  %v1215 = vpop.f32.mrb[0].mxu0
  %1216 = vdwg.mxu0
  %v1217 = vadd.f32 %v384, 1e-06
  %v1218 = vadd.f32 %v751, 1e-06
  %v1219 = vadd.f32 %v1148, 1e-06
  %v1220 = vmul.f32 %v1217, %v1217
  %1221 = vadd.xlane.f32.xlu0 %v1220
  %v1222 = vpop.xlane.xlu0 %1221
  %v1223 = vmul.f32 %v1218, %v1218
  %v1224 = vsel %vm688, %v1223, 0.0
  %1225 = vadd.xlane.f32.xlu0 %v1224
  %v1226 = vpop.xlane.xlu0 %1225
  %v1227 = vadd.f32 %v1222, %v1226
  %v1228 = vmul.f32 %v1219, %v1219
  %v1229 = vsel %vm688, %v1228, 0.0
  %1230 = vadd.xlane.f32.xlu0 %v1229
  %v1231 = vpop.xlane.xlu0 %1230
  %v1232 = vadd.f32 %v1227, %v1231
  %v1233 = vmul.f32 %v387, %v387
  %v1234 = vmul.f32 %v392, %v392
  %v1235 = vmul.f32 %v395, %v395
  %v1236 = vmul.f32 %v400, %v400
  %v1237 = vmul.f32 %v403, %v403
  %v1238 = vmul.f32 %v408, %v408
  %v1239 = vmul.f32 %v411, %v411
  %v1240 = vmul.f32 %v416, %v416
  %v1241 = vmul.f32 %v419, %v419
  %v1242 = vmul.f32 %v424, %v424
  %v1243 = vmul.f32 %v427, %v427
  %v1244 = vmul.f32 %v432, %v432
  %v1245 = vmul.f32 %v435, %v435
  %v1246 = vmul.f32 %v440, %v440
  %v1247 = vmul.f32 %v443, %v443
  %v1248 = vmul.f32 %v448, %v448
  %1249 = vadd.xlane.f32.xlu0 %v1233
  %v1250 = vpop.xlane.xlu0 %1249
  %1251 = vadd.xlane.f32.xlu0 %v1234
  %v1252 = vpop.xlane.xlu0 %1251
  %1253 = vadd.xlane.f32.xlu0 %v1235
  %v1254 = vpop.xlane.xlu0 %1253
  %1255 = vadd.xlane.f32.xlu0 %v1236
  %v1256 = vpop.xlane.xlu0 %1255
  %1257 = vadd.xlane.f32.xlu0 %v1237
  %v1258 = vpop.xlane.xlu0 %1257
  %1259 = vadd.xlane.f32.xlu0 %v1238
  %v1260 = vpop.xlane.xlu0 %1259
  %1261 = vadd.xlane.f32.xlu0 %v1239
  %v1262 = vpop.xlane.xlu0 %1261
  %1263 = vadd.xlane.f32.xlu0 %v1240
  %v1264 = vpop.xlane.xlu0 %1263
  %1265 = vadd.xlane.f32.xlu0 %v1241
  %v1266 = vpop.xlane.xlu0 %1265
  %1267 = vadd.xlane.f32.xlu0 %v1242
  %v1268 = vpop.xlane.xlu0 %1267
  %1269 = vadd.xlane.f32.xlu0 %v1243
  %v1270 = vpop.xlane.xlu0 %1269
  %1271 = vadd.xlane.f32.xlu0 %v1244
  %v1272 = vpop.xlane.xlu0 %1271
  %1273 = vadd.xlane.f32.xlu0 %v1245
  %v1274 = vpop.xlane.xlu0 %1273
  %1275 = vadd.xlane.f32.xlu0 %v1246
  %v1276 = vpop.xlane.xlu0 %1275
  %1277 = vadd.xlane.f32.xlu0 %v1247
  %v1278 = vpop.xlane.xlu0 %1277
  %1279 = vadd.xlane.f32.xlu0 %v1248
  %v1280 = vpop.xlane.xlu0 %1279
  %v1281 = vmul.f32 %v754, %v754
  %v1282 = vmul.f32 %v759, %v759
  %v1283 = vmul.f32 %v762, %v762
  %v1284 = vmul.f32 %v767, %v767
  %v1285 = vmul.f32 %v770, %v770
  %v1286 = vmul.f32 %v775, %v775
  %v1287 = vmul.f32 %v778, %v778
  %v1288 = vmul.f32 %v783, %v783
  %v1289 = vmul.f32 %v786, %v786
  %v1290 = vmul.f32 %v791, %v791
  %v1291 = vmul.f32 %v794, %v794
  %v1292 = vmul.f32 %v799, %v799
  %v1293 = vmul.f32 %v802, %v802
  %v1294 = vmul.f32 %v807, %v807
  %v1295 = vmul.f32 %v810, %v810
  %v1296 = vmul.f32 %v815, %v815
  %v1297 = vsel %vm688, %v1281, 0.0
  %1298 = vadd.xlane.f32.xlu0 %v1297
  %v1299 = vpop.xlane.xlu0 %1298
  %v1300 = vsel %vm688, %v1282, 0.0
  %1301 = vadd.xlane.f32.xlu0 %v1300
  %v1302 = vpop.xlane.xlu0 %1301
  %v1303 = vsel %vm688, %v1283, 0.0
  %1304 = vadd.xlane.f32.xlu0 %v1303
  %v1305 = vpop.xlane.xlu0 %1304
  %v1306 = vsel %vm688, %v1284, 0.0
  %1307 = vadd.xlane.f32.xlu0 %v1306
  %v1308 = vpop.xlane.xlu0 %1307
  %v1309 = vsel %vm688, %v1285, 0.0
  %1310 = vadd.xlane.f32.xlu0 %v1309
  %v1311 = vpop.xlane.xlu0 %1310
  %v1312 = vsel %vm688, %v1286, 0.0
  %1313 = vadd.xlane.f32.xlu0 %v1312
  %v1314 = vpop.xlane.xlu0 %1313
  %v1315 = vsel %vm688, %v1287, 0.0
  %1316 = vadd.xlane.f32.xlu0 %v1315
  %v1317 = vpop.xlane.xlu0 %1316
  %v1318 = vsel %vm688, %v1288, 0.0
  %1319 = vadd.xlane.f32.xlu0 %v1318
  %v1320 = vpop.xlane.xlu0 %1319
  %v1321 = vsel %vm688, %v1289, 0.0
  %1322 = vadd.xlane.f32.xlu0 %v1321
  %v1323 = vpop.xlane.xlu0 %1322
  %v1324 = vsel %vm688, %v1290, 0.0
  %1325 = vadd.xlane.f32.xlu0 %v1324
  %v1326 = vpop.xlane.xlu0 %1325
  %v1327 = vsel %vm688, %v1291, 0.0
  %1328 = vadd.xlane.f32.xlu0 %v1327
  %v1329 = vpop.xlane.xlu0 %1328
  %v1330 = vsel %vm688, %v1292, 0.0
  %1331 = vadd.xlane.f32.xlu0 %v1330
  %v1332 = vpop.xlane.xlu0 %1331
  %v1333 = vsel %vm688, %v1293, 0.0
  %1334 = vadd.xlane.f32.xlu0 %v1333
  %v1335 = vpop.xlane.xlu0 %1334
  %v1336 = vsel %vm688, %v1294, 0.0
  %1337 = vadd.xlane.f32.xlu0 %v1336
  %v1338 = vpop.xlane.xlu0 %1337
  %v1339 = vsel %vm688, %v1295, 0.0
  %1340 = vadd.xlane.f32.xlu0 %v1339
  %v1341 = vpop.xlane.xlu0 %1340
  %v1342 = vsel %vm688, %v1296, 0.0
  %1343 = vadd.xlane.f32.xlu0 %v1342
  %v1344 = vpop.xlane.xlu0 %1343
  %v1345 = vadd.f32 %v1250, %v1299
  %v1346 = vadd.f32 %v1252, %v1302
  %v1347 = vadd.f32 %v1254, %v1305
  %v1348 = vadd.f32 %v1256, %v1308
  %v1349 = vadd.f32 %v1258, %v1311
  %v1350 = vadd.f32 %v1260, %v1314
  %v1351 = vadd.f32 %v1262, %v1317
  %v1352 = vadd.f32 %v1264, %v1320
  %v1353 = vadd.f32 %v1266, %v1323
  %v1354 = vadd.f32 %v1268, %v1326
  %v1355 = vadd.f32 %v1270, %v1329
  %v1356 = vadd.f32 %v1272, %v1332
  %v1357 = vadd.f32 %v1274, %v1335
  %v1358 = vadd.f32 %v1276, %v1338
  %v1359 = vadd.f32 %v1278, %v1341
  %v1360 = vadd.f32 %v1280, %v1344
  %v1361 = vmul.f32 %v1151, %v1151
  %v1362 = vmul.f32 %v1156, %v1156
  %v1363 = vmul.f32 %v1159, %v1159
  %v1364 = vmul.f32 %v1164, %v1164
  %v1365 = vmul.f32 %v1167, %v1167
  %v1366 = vmul.f32 %v1172, %v1172
  %v1367 = vmul.f32 %v1175, %v1175
  %v1368 = vmul.f32 %v1180, %v1180
  %v1369 = vmul.f32 %v1183, %v1183
  %v1370 = vmul.f32 %v1188, %v1188
  %v1371 = vmul.f32 %v1191, %v1191
  %v1372 = vmul.f32 %v1196, %v1196
  %v1373 = vmul.f32 %v1199, %v1199
  %v1374 = vmul.f32 %v1204, %v1204
  %v1375 = vmul.f32 %v1207, %v1207
  %v1376 = vmul.f32 %v1212, %v1212
  %v1377 = vsel %vm688, %v1361, 0.0
  %1378 = vadd.xlane.f32.xlu0 %v1377
  %v1379 = vpop.xlane.xlu0 %1378
  %v1380 = vsel %vm688, %v1362, 0.0
  %1381 = vadd.xlane.f32.xlu0 %v1380
  %v1382 = vpop.xlane.xlu0 %1381
  %v1383 = vsel %vm688, %v1363, 0.0
  %1384 = vadd.xlane.f32.xlu0 %v1383
  %v1385 = vpop.xlane.xlu0 %1384
  %v1386 = vsel %vm688, %v1364, 0.0
  %1387 = vadd.xlane.f32.xlu0 %v1386
  %v1388 = vpop.xlane.xlu0 %1387
  %v1389 = vsel %vm688, %v1365, 0.0
  %1390 = vadd.xlane.f32.xlu0 %v1389
  %v1391 = vpop.xlane.xlu0 %1390
  %v1392 = vsel %vm688, %v1366, 0.0
  %1393 = vadd.xlane.f32.xlu0 %v1392
  %v1394 = vpop.xlane.xlu0 %1393
  %v1395 = vsel %vm688, %v1367, 0.0
  %1396 = vadd.xlane.f32.xlu0 %v1395
  %v1397 = vpop.xlane.xlu0 %1396
  %v1398 = vsel %vm688, %v1368, 0.0
  %1399 = vadd.xlane.f32.xlu0 %v1398
  %v1400 = vpop.xlane.xlu0 %1399
  %v1401 = vsel %vm688, %v1369, 0.0
  %1402 = vadd.xlane.f32.xlu0 %v1401
  %v1403 = vpop.xlane.xlu0 %1402
  %v1404 = vsel %vm688, %v1370, 0.0
  %1405 = vadd.xlane.f32.xlu0 %v1404
  %v1406 = vpop.xlane.xlu0 %1405
  %v1407 = vsel %vm688, %v1371, 0.0
  %1408 = vadd.xlane.f32.xlu0 %v1407
  %v1409 = vpop.xlane.xlu0 %1408
  %v1410 = vsel %vm688, %v1372, 0.0
  %1411 = vadd.xlane.f32.xlu0 %v1410
  %v1412 = vpop.xlane.xlu0 %1411
  %v1413 = vsel %vm688, %v1373, 0.0
  %1414 = vadd.xlane.f32.xlu0 %v1413
  %v1415 = vpop.xlane.xlu0 %1414
  %v1416 = vsel %vm688, %v1374, 0.0
  %1417 = vadd.xlane.f32.xlu0 %v1416
  %v1418 = vpop.xlane.xlu0 %1417
  %v1419 = vsel %vm688, %v1375, 0.0
  %1420 = vadd.xlane.f32.xlu0 %v1419
  %v1421 = vpop.xlane.xlu0 %1420
  %v1422 = vsel %vm688, %v1376, 0.0
  %1423 = vadd.xlane.f32.xlu0 %v1422
  %v1424 = vpop.xlane.xlu0 %1423
  %v1425 = vadd.f32 %v1345, %v1379
  %v1426 = vadd.f32 %v1346, %v1382
  %v1427 = vadd.f32 %v1347, %v1385
  %v1428 = vadd.f32 %v1348, %v1388
  %v1429 = vadd.f32 %v1349, %v1391
  %v1430 = vadd.f32 %v1350, %v1394
  %v1431 = vadd.f32 %v1351, %v1397
  %v1432 = vadd.f32 %v1352, %v1400
  %v1433 = vadd.f32 %v1353, %v1403
  %v1434 = vadd.f32 %v1354, %v1406
  %v1435 = vadd.f32 %v1355, %v1409
  %v1436 = vadd.f32 %v1356, %v1412
  %v1437 = vadd.f32 %v1357, %v1415
  %v1438 = vadd.f32 %v1358, %v1418
  %v1439 = vadd.f32 %v1359, %v1421
  %v1440 = vadd.f32 %v1360, %v1424
  %v1442 = vsel %vm688, %v1218, 0
  %v1445 = vsel %vm688, %v754, 0
  %v1448 = vsel %vm688, %v759, 0
  %v1451 = vsel %vm688, %v762, 0
  %v1454 = vsel %vm688, %v767, 0
  %v1457 = vsel %vm688, %v770, 0
  %v1460 = vsel %vm688, %v775, 0
  %v1463 = vsel %vm688, %v778, 0
  %v1466 = vsel %vm688, %v783, 0
  %v1469 = vsel %vm688, %v786, 0
  %v1472 = vsel %vm688, %v791, 0
  %v1475 = vsel %vm688, %v794, 0
  %v1478 = vsel %vm688, %v799, 0
  %v1481 = vsel %vm688, %v802, 0
  %v1484 = vsel %vm688, %v807, 0
  %v1487 = vsel %vm688, %v810, 0
  %v1490 = vsel %vm688, %v815, 0
  %1492 = vmatprep.subr.mxu0 0.0
  %1493 = vmatpush1.xpose.msra.mxu0 %v1445
  %1494 = vmatprep.subr.mxu0 0.0
  %1495 = vmatpush1.xpose.msra.mxu0 %v1448
  %1496 = vmatprep.subr.mxu0 0.0
  %1497 = vmatpush1.xpose.msra.mxu0 %v1451
  %1498 = vmatprep.subr.mxu0 0.0
  %1499 = vmatpush1.xpose.msra.mxu0 %v1454
  %1500 = vmatprep.subr.mxu0 0.0
  %1501 = vmatpush1.xpose.msra.mxu0 %v1457
  %1502 = vmatprep.subr.mxu0 0.0
  %1503 = vmatpush1.xpose.msra.mxu0 %v1460
  %1504 = vmatprep.subr.mxu0 0.0
  %1505 = vmatpush1.xpose.msra.mxu0 %v1463
  %1506 = vmatprep.subr.mxu0 0.0
  %1507 = vmatpush1.xpose.msra.mxu0 %v1466
  %1508 = vmatprep.subr.mxu0 0.0
  %1509 = vmatpush1.xpose.msra.mxu0 %v1469
  %1510 = vmatprep.subr.mxu0 0.0
  %1511 = vmatpush1.xpose.msra.mxu0 %v1472
  %1512 = vmatprep.subr.mxu0 0.0
  %1513 = vmatpush1.xpose.msra.mxu0 %v1475
  %1514 = vmatprep.subr.mxu0 0.0
  %1515 = vmatpush1.xpose.msra.mxu0 %v1478
  %1516 = vmatprep.subr.mxu0 0.0
  %1517 = vmatpush1.xpose.msra.mxu0 %v1481
  %1518 = vmatprep.subr.mxu0 0.0
  %1519 = vmatpush1.xpose.msra.mxu0 %v1484
  %1520 = vmatprep.subr.mxu0 0.0
  %1521 = vmatpush1.xpose.msra.mxu0 %v1487
  %1522 = vmatprep.subr.mxu0 0.0
  %1523 = vmatpush1.xpose.msra.mxu0 %v1490
  %1524 = vmatprep.subr.mxu0 0.0
  %1525 = vmatpush1.xpose.msra.mxu0 0.0
  %1526 = vmatprep.subr.mxu0 0.0
  %1527 = vmatpush1.xpose.msra.mxu0 0.0
  %1528 = vmatprep.subr.mxu0 0.0
  %1529 = vmatpush1.xpose.msra.mxu0 0.0
  %1530 = vmatprep.subr.mxu0 0.0
  %1531 = vmatpush1.xpose.msra.mxu0 0.0
  %1532 = vmatprep.subr.mxu0 0.0
  %1533 = vmatpush1.xpose.msra.mxu0 0.0
  %1534 = vmatprep.subr.mxu0 0.0
  %1535 = vmatpush1.xpose.msra.mxu0 0.0
  %1536 = vmatprep.subr.mxu0 0.0
  %1537 = vmatpush1.xpose.msra.mxu0 0.0
  %1538 = vmatprep.subr.mxu0 0.0
  %1539 = vmatpush1.xpose.msra.mxu0 0.0
  %1540 = vmatprep.subr.mxu0 0.0
  %1541 = vmatpush1.xpose.msra.mxu0 0.0
  %1542 = vmatprep.subr.mxu0 0.0
  %1543 = vmatpush1.xpose.msra.mxu0 0.0
  %1544 = vmatprep.subr.mxu0 0.0
  %1545 = vmatpush1.xpose.msra.mxu0 0.0
  %1546 = vmatprep.subr.mxu0 0.0
  %1547 = vmatpush1.xpose.msra.mxu0 0.0
  %1548 = vmatprep.subr.mxu0 0.0
  %1549 = vmatpush1.xpose.msra.mxu0 0.0
  %1550 = vmatprep.subr.mxu0 0.0
  %1551 = vmatpush1.xpose.msra.mxu0 0.0
  %1552 = vmatprep.subr.mxu0 0.0
  %1553 = vmatpush1.xpose.msra.mxu0 0.0
  %1554 = vmatprep.subr.mxu0 0.0
  %1555 = vmatpush1.xpose.msra.mxu0 0.0
  %1556 = vmatprep.mubr.f32.mxu0 0.0
  %1557 = vmatmul.mubr.f32.gmra.mrb[0].mxu0 %v1442
  %v1558 = vpop.f32.mrb[0].mxu0
  %v1559 = vadd.f32 0.0, %v1558
  %v1560 = vpop.f32.mrb[0].mxu0
  %1561 = vdwg.mxu0
  %1562 = vmatprep.subr.mxu0 0.0
  %1563 = vmatpush1.xpose.msra.mxu0 %v387
  %1564 = vmatprep.subr.mxu0 0.0
  %1565 = vmatpush1.xpose.msra.mxu0 %v392
  %1566 = vmatprep.subr.mxu0 0.0
  %1567 = vmatpush1.xpose.msra.mxu0 %v395
  %1568 = vmatprep.subr.mxu0 0.0
  %1569 = vmatpush1.xpose.msra.mxu0 %v400
  %1570 = vmatprep.subr.mxu0 0.0
  %1571 = vmatpush1.xpose.msra.mxu0 %v403
  %1572 = vmatprep.subr.mxu0 0.0
  %1573 = vmatpush1.xpose.msra.mxu0 %v408
  %1574 = vmatprep.subr.mxu0 0.0
  %1575 = vmatpush1.xpose.msra.mxu0 %v411
  %1576 = vmatprep.subr.mxu0 0.0
  %1577 = vmatpush1.xpose.msra.mxu0 %v416
  %1578 = vmatprep.subr.mxu0 0.0
  %1579 = vmatpush1.xpose.msra.mxu0 %v419
  %1580 = vmatprep.subr.mxu0 0.0
  %1581 = vmatpush1.xpose.msra.mxu0 %v424
  %1582 = vmatprep.subr.mxu0 0.0
  %1583 = vmatpush1.xpose.msra.mxu0 %v427
  %1584 = vmatprep.subr.mxu0 0.0
  %1585 = vmatpush1.xpose.msra.mxu0 %v432
  %1586 = vmatprep.subr.mxu0 0.0
  %1587 = vmatpush1.xpose.msra.mxu0 %v435
  %1588 = vmatprep.subr.mxu0 0.0
  %1589 = vmatpush1.xpose.msra.mxu0 %v440
  %1590 = vmatprep.subr.mxu0 0.0
  %1591 = vmatpush1.xpose.msra.mxu0 %v443
  %1592 = vmatprep.subr.mxu0 0.0
  %1593 = vmatpush1.xpose.msra.mxu0 %v448
  %1594 = vmatprep.subr.mxu0 0.0
  %1595 = vmatpush1.xpose.msra.mxu0 0.0
  %1596 = vmatprep.subr.mxu0 0.0
  %1597 = vmatpush1.xpose.msra.mxu0 0.0
  %1598 = vmatprep.subr.mxu0 0.0
  %1599 = vmatpush1.xpose.msra.mxu0 0.0
  %1600 = vmatprep.subr.mxu0 0.0
  %1601 = vmatpush1.xpose.msra.mxu0 0.0
  %1602 = vmatprep.subr.mxu0 0.0
  %1603 = vmatpush1.xpose.msra.mxu0 0.0
  %1604 = vmatprep.subr.mxu0 0.0
  %1605 = vmatpush1.xpose.msra.mxu0 0.0
  %1606 = vmatprep.subr.mxu0 0.0
  %1607 = vmatpush1.xpose.msra.mxu0 0.0
  %1608 = vmatprep.subr.mxu0 0.0
  %1609 = vmatpush1.xpose.msra.mxu0 0.0
  %1610 = vmatprep.subr.mxu0 0.0
  %1611 = vmatpush1.xpose.msra.mxu0 0.0
  %1612 = vmatprep.subr.mxu0 0.0
  %1613 = vmatpush1.xpose.msra.mxu0 0.0
  %1614 = vmatprep.subr.mxu0 0.0
  %1615 = vmatpush1.xpose.msra.mxu0 0.0
  %1616 = vmatprep.subr.mxu0 0.0
  %1617 = vmatpush1.xpose.msra.mxu0 0.0
  %1618 = vmatprep.subr.mxu0 0.0
  %1619 = vmatpush1.xpose.msra.mxu0 0.0
  %1620 = vmatprep.subr.mxu0 0.0
  %1621 = vmatpush1.xpose.msra.mxu0 0.0
  %1622 = vmatprep.subr.mxu0 0.0
  %1623 = vmatpush1.xpose.msra.mxu0 0.0
  %1624 = vmatprep.subr.mxu0 0.0
  %1625 = vmatpush1.xpose.msra.mxu0 0.0
  %1626 = vmatprep.mubr.f32.mxu0 0.0
  %1627 = vmatmul.mubr.f32.gmra.mrb[0].mxu0 %v1217
  %v1628 = vpop.f32.mrb[0].mxu0
  %v1629 = vadd.f32 %v1559, %v1628
  %v1630 = vpop.f32.mrb[0].mxu0
  %1631 = vdwg.mxu0
  %v1633 = vsel %vm688, %v1219, 0
  %v1636 = vsel %vm688, %v1151, 0
  %v1639 = vsel %vm688, %v1156, 0
  %v1642 = vsel %vm688, %v1159, 0
  %v1645 = vsel %vm688, %v1164, 0
  %v1648 = vsel %vm688, %v1167, 0
  %v1651 = vsel %vm688, %v1172, 0
  %v1654 = vsel %vm688, %v1175, 0
  %v1657 = vsel %vm688, %v1180, 0
  %v1660 = vsel %vm688, %v1183, 0
  %v1663 = vsel %vm688, %v1188, 0
  %v1666 = vsel %vm688, %v1191, 0
  %v1669 = vsel %vm688, %v1196, 0
  %v1672 = vsel %vm688, %v1199, 0
  %v1675 = vsel %vm688, %v1204, 0
  %v1678 = vsel %vm688, %v1207, 0
  %v1681 = vsel %vm688, %v1212, 0
  %1683 = vmatprep.subr.mxu0 0.0
  %1684 = vmatpush1.xpose.msra.mxu0 %v1636
  %1685 = vmatprep.subr.mxu0 0.0
  %1686 = vmatpush1.xpose.msra.mxu0 %v1639
  %1687 = vmatprep.subr.mxu0 0.0
  %1688 = vmatpush1.xpose.msra.mxu0 %v1642
  %1689 = vmatprep.subr.mxu0 0.0
  %1690 = vmatpush1.xpose.msra.mxu0 %v1645
  %1691 = vmatprep.subr.mxu0 0.0
  %1692 = vmatpush1.xpose.msra.mxu0 %v1648
  %1693 = vmatprep.subr.mxu0 0.0
  %1694 = vmatpush1.xpose.msra.mxu0 %v1651
  %1695 = vmatprep.subr.mxu0 0.0
  %1696 = vmatpush1.xpose.msra.mxu0 %v1654
  %1697 = vmatprep.subr.mxu0 0.0
  %1698 = vmatpush1.xpose.msra.mxu0 %v1657
  %1699 = vmatprep.subr.mxu0 0.0
  %1700 = vmatpush1.xpose.msra.mxu0 %v1660
  %1701 = vmatprep.subr.mxu0 0.0
  %1702 = vmatpush1.xpose.msra.mxu0 %v1663
  %1703 = vmatprep.subr.mxu0 0.0
  %1704 = vmatpush1.xpose.msra.mxu0 %v1666
  %1705 = vmatprep.subr.mxu0 0.0
  %1706 = vmatpush1.xpose.msra.mxu0 %v1669
  %1707 = vmatprep.subr.mxu0 0.0
  %1708 = vmatpush1.xpose.msra.mxu0 %v1672
  %1709 = vmatprep.subr.mxu0 0.0
  %1710 = vmatpush1.xpose.msra.mxu0 %v1675
  %1711 = vmatprep.subr.mxu0 0.0
  %1712 = vmatpush1.xpose.msra.mxu0 %v1678
  %1713 = vmatprep.subr.mxu0 0.0
  %1714 = vmatpush1.xpose.msra.mxu0 %v1681
  %1715 = vmatprep.subr.mxu0 0.0
  %1716 = vmatpush1.xpose.msra.mxu0 0.0
  %1717 = vmatprep.subr.mxu0 0.0
  %1718 = vmatpush1.xpose.msra.mxu0 0.0
  %1719 = vmatprep.subr.mxu0 0.0
  %1720 = vmatpush1.xpose.msra.mxu0 0.0
  %1721 = vmatprep.subr.mxu0 0.0
  %1722 = vmatpush1.xpose.msra.mxu0 0.0
  %1723 = vmatprep.subr.mxu0 0.0
  %1724 = vmatpush1.xpose.msra.mxu0 0.0
  %1725 = vmatprep.subr.mxu0 0.0
  %1726 = vmatpush1.xpose.msra.mxu0 0.0
  %1727 = vmatprep.subr.mxu0 0.0
  %1728 = vmatpush1.xpose.msra.mxu0 0.0
  %1729 = vmatprep.subr.mxu0 0.0
  %1730 = vmatpush1.xpose.msra.mxu0 0.0
  %1731 = vmatprep.subr.mxu0 0.0
  %1732 = vmatpush1.xpose.msra.mxu0 0.0
  %1733 = vmatprep.subr.mxu0 0.0
  %1734 = vmatpush1.xpose.msra.mxu0 0.0
  %1735 = vmatprep.subr.mxu0 0.0
  %1736 = vmatpush1.xpose.msra.mxu0 0.0
  %1737 = vmatprep.subr.mxu0 0.0
  %1738 = vmatpush1.xpose.msra.mxu0 0.0
  %1739 = vmatprep.subr.mxu0 0.0
  %1740 = vmatpush1.xpose.msra.mxu0 0.0
  %1741 = vmatprep.subr.mxu0 0.0
  %1742 = vmatpush1.xpose.msra.mxu0 0.0
  %1743 = vmatprep.subr.mxu0 0.0
  %1744 = vmatpush1.xpose.msra.mxu0 0.0
  %1745 = vmatprep.subr.mxu0 0.0
  %1746 = vmatpush1.xpose.msra.mxu0 0.0
  %1747 = vmatprep.mubr.f32.mxu0 0.0
  %1748 = vmatmul.mubr.f32.gmra.mrb[0].mxu0 %v1633
  %v1749 = vpop.f32.mrb[0].mxu0
  %v1750 = vadd.f32 0.0, %v1749
  %v1751 = vpop.f32.mrb[0].mxu0
  %1752 = vdwg.mxu0
  %v1753 = vadd.f32 %v1629, %v1750
  %1754 = vxpose.xlu0.b32.start [1/16] %v1425, 128
  %1755 = vxpose.xlu0.b32.cont [2/16] %v1426, 128
  %1756 = vxpose.xlu0.b32.cont [3/16] %v1427, 128
  %1757 = vxpose.xlu0.b32.cont [4/16] %v1428, 128
  %1758 = vxpose.xlu0.b32.cont [5/16] %v1429, 128
  %1759 = vxpose.xlu0.b32.cont [6/16] %v1430, 128
  %1760 = vxpose.xlu0.b32.cont [7/16] %v1431, 128
  %1761 = vxpose.xlu0.b32.cont [8/16] %v1432, 128
  %1762 = vxpose.xlu0.b32.cont [9/16] %v1433, 128
  %1763 = vxpose.xlu0.b32.cont [10/16] %v1434, 128
  %1764 = vxpose.xlu0.b32.cont [11/16] %v1435, 128
  %1765 = vxpose.xlu0.b32.cont [12/16] %v1436, 128
  %1766 = vxpose.xlu0.b32.cont [13/16] %v1437, 128
  %1767 = vxpose.xlu0.b32.cont [14/16] %v1438, 128
  %1768 = vxpose.xlu0.b32.cont [15/16] %v1439, 128
  %1769 = vxpose.xlu0.b32.end [16/16] %v1440, 128
  %v1770 = vpop.trf.xlu0
  %v1771 = vpop.trf.xlu0
  %v1772 = vpop.trf.xlu0
  %v1773 = vpop.trf.xlu0
  %v1774 = vpop.trf.xlu0
  %v1775 = vpop.trf.xlu0
  %v1776 = vpop.trf.xlu0
  %v1777 = vpop.trf.xlu0
  %v1778 = vpop.trf.xlu0
  %v1779 = vpop.trf.xlu0
  %v1780 = vpop.trf.xlu0
  %v1781 = vpop.trf.xlu0
  %v1782 = vpop.trf.xlu0
  %v1783 = vpop.trf.xlu0
  %v1784 = vpop.trf.xlu0
  %v1785 = vpop.trf.xlu0
  %v1786 = vlaneseq
  %v1787 = vshrl.u32 %v1786, 7
  %v1788 = vsub.s32 0, %v1787
  %v1789 = vrot.slane %v1770, %v1788
  %v1790 = vadd.f32 %v1232, %v1789
  %v1791 = vmul.f32 %v1753, 2.0
  %v1792 = vsub.f32 %v1790, %v1791
  %v1793 = vmax.f32 %v1792, 0.0
  %v1794 = vrsqrt.pop %v1793
  %v1795 = vmul.f32 %v1793, %v1794
  %vm1796 = vcmp.eq.f32.partialorder %v1793, inf
  %v1797 = vsel %vm1796, %v1793, %v1795
  %vm1798 = vcmp.eq.f32.partialorder %v1793, 0.0
  %v1799 = vand.u32 %v1793, 2147483648
  %v1800 = vsel %vm1798, %v1799, %v1797
  %1801 = vst [vmem:[%s15] sm:$0xff] %v1800
  // Predicated region
  $region62: #{track_head_forward.1} parent=0 // pred_check
    _
  $region63: #{track_head_forward.1} parent=0 // pred_check_branch
    %1803 = sbr.rel (0) target = $region65
  $region64: #{track_head_forward.1} parent=0 // pred_region
    _
  $region65: #{track_head_forward.1} parent=0 // pred_fallthru
    _
  // Predicated region
  $region66: #{track_head_forward.1} parent=0 // pred_check
    _
  $region67: #{track_head_forward.1} parent=0 // pred_check_branch
    %1805 = sbr.rel (0) target = $region69
  $region68: #{track_head_forward.1} parent=0 // pred_region
    _
  $region69: #{track_head_forward.1} parent=0 // pred_fallthru
    _

</llo_original>
